<compile_context>
chip_gen: v5e
topology: v5e:2x2
jax: 0.10.0
libtpu: 0.0.40
codegen_flags: <defaults>
</compile_context>

<pallas_src>
import numpy as np
import jax
import jax.numpy as jnp
from jax import lax
from jax.experimental import pallas as pl
from jax.experimental.pallas import tpu as pltpu

# corner offsets, same ordering as the PyTorch BOX_OFFSETS (i, j, k nested loops)
BOX_OFFSETS = [(i, j, k) for i in (0, 1) for j in (0, 1) for k in (0, 1)]
_PRIMES = (np.int32(73856093), np.int32(19349663), np.int32(83492791))


def _f32(v):
    """Exact Python-float representation of the f32 value of v."""
    return float(np.float32(v))


def make_grid_kernel(box_min, box_max, resolutions, log2_hashmap_size,
                     hsize, n_features, packed):
    """Build the Pallas kernel for one batch tile (all levels)."""
    bmin = [_f32(v) for v in np.asarray(box_min)]
    bmax = [_f32(v) for v in np.asarray(box_max)]
    mask = np.int32((1 << log2_hashmap_size) - 1)
    n_levels = len(resolutions)
    # Per-level / per-axis grid size, computed in f32 exactly like the reference
    # ((box_max - box_min) / float32(resolution)) so floor((x-bmin)/gs) matches.
    gs_all = [[_f32((np.float32(bmax[a]) - np.float32(bmin[a]))
                    / np.float32(resolutions[lvl]))
               for a in range(3)] for lvl in range(n_levels)]

    def kernel(x_ref, *refs):
        o_ref = refs[-1]
        xT = x_ref[...]                                  # (3, tb), lane-major

        # Clamp once (level independent); each xs[a] is (1, tb).
        xs = [jnp.clip(xT[a:a + 1, :], bmin[a], bmax[a]) for a in range(3)]

        # Hoisted out of the level loop; matches the (hsize, tb) W orientation.
        sub_iota = lax.broadcasted_iota(jnp.int32, (hsize, 1), 0)

        w_blocks = []       # packed path
        embs = []           # per-level path
        for lvl in range(n_levels):
            hterm = []      # hterm[a] = (bl*P_a, (bl+1)*P_a), int32 wraparound
            wpair = []      # wpair[a] = (1 - w_a, w_a)
            for a in range(3):
                gs = gs_all[lvl][a]
                bl = jnp.floor((xs[a] - bmin[a]) / gs).astype(jnp.int32)
                vmin = bl.astype(jnp.float32) * gs + bmin[a]
                vmax = vmin + gs
                w = (xs[a] - vmin) / (vmax - vmin)
                hterm.append((bl * _PRIMES[a],
                              (bl + np.int32(1)) * _PRIMES[a]))
                wpair.append((1.0 - w, w))

            # Scatter the 8 trilinear weights into a one-hot weight matrix:
            # W[hash_c, b] += w_c.  h and wt stay lane-dense (1, tb).
            Wl = None
            for (oi, oj, ok) in BOX_OFFSETS:
                h = (hterm[0][oi] ^ hterm[1][oj] ^ hterm[2][ok]) & mask   # (1, tb)
                wt = wpair[0][oi] * wpair[1][oj] * wpair[2][ok]           # (1, tb)
                contrib = jnp.where(sub_iota == h, wt, 0.0)               # (hsize, tb)
                Wl = contrib if Wl is None else Wl + contrib

            if packed:
                w_blocks.append(Wl)
            else:
                # (hsize, tb)^T @ (hsize, F) -> (tb, F); contraction over dim 0
                # of both operands (same dot_general form as flash-attn bwd).
                emb = lax.dot_general(
                    Wl, refs[lvl][...],
                    dimension_numbers=(((0,), (0,)), ((), ())),
                    preferred_element_type=jnp.float32)
                embs.append(emb)

        if packed:
            # One block-diagonal matmul for ALL levels: full MXU column width and
            # the result is already level-concatenated.
            w_cat = w_blocks[0] if n_levels == 1 else jnp.concatenate(w_blocks, axis=0)
            out = lax.dot_general(
                w_cat, refs[0][...],
                dimension_numbers=(((0,), (0,)), ((), ())),
                preferred_element_type=jnp.float32)                        # (tb, nL*F)
        else:
            out = embs[0] if n_levels == 1 else jnp.concatenate(embs, axis=-1)

        # Single full-width store per tile (no per-level narrow column stores).
        o_ref[...] = out.astype(o_ref.dtype)

    return kernel


def _vmem_limit_bytes(needed_bytes):
    """Pick an explicit vmem limit, capped by the chip's physical VMEM."""
    try:
        cap = int(pltpu.get_tpu_info().vmem_capacity_bytes)
    except Exception:
        cap = 64 << 20          # v7x per-TC VMEM; conservative fallback
    want = int(1.5 * needed_bytes) + (8 << 20)
    return max(32 << 20, min(want, int(cap * 0.85)))


def grid_embedder_forward(x, tables, box_min, box_max, resolutions,
                          log2_hashmap_size, tb=256, pack_levels=None):
    """x: (B, 3) f32; tables: list of (T_i, F) f32.  Returns (B, n_levels*F)."""
    B = int(x.shape[0])
    n_levels = len(tables)
    F = int(tables[0].shape[1])
    hsize = 1 << log2_hashmap_size
    for t in tables:
        assert int(t.shape[1]) == F
        # hashes land in [0, hsize); rows past hsize are never addressed
        assert hsize <= int(t.shape[0]), (
            "2**log2_hashmap_size must not exceed the embedding table size")

    # Pack levels into one block-diagonal matmul when the zero-padded RHS is
    # small enough to stay VMEM-resident; otherwise fall back to one matmul
    # per level (still a single wide output store).
    if pack_levels is None:
        pack_levels = (n_levels * hsize) * (n_levels * F) * 4 <= (4 << 20)

    kernel = make_grid_kernel(box_min, box_max, resolutions, log2_hashmap_size,
                              hsize, F, pack_levels)

    # Lane-major coordinates: (3, B) so per-axis math in-kernel is (1, tb).
    xT = jnp.transpose(x.astype(jnp.float32))            # (3, B)
    n_tiles = pl.cdiv(B, tb)
    Bp = n_tiles * tb
    if Bp != B:
        # Padded points are clamped inside the kernel (valid memory, garbage
        # values) and their output rows are sliced off below.
        xT = jnp.pad(xT, ((0, 0), (0, Bp - B)))

    x_spec = pl.BlockSpec((3, tb), lambda i: (0, i))
    out_spec = pl.BlockSpec((tb, n_levels * F), lambda i: (i, 0))

    if pack_levels:
        # Block-diagonal RHS (built once; in a real embedder cache this at init).
        rhs = jnp.zeros((n_levels * hsize, n_levels * F), jnp.float32)
        for l in range(n_levels):
            rhs = rhs.at[l * hsize:(l + 1) * hsize, l * F:(l + 1) * F].set(
                tables[l][:hsize])
        operands = (xT, rhs)
        tab_specs = [pl.BlockSpec((n_levels * hsize, n_levels * F),
                                  lambda i: (0, 0))]
        resident = (n_levels * hsize) * (n_levels * F) * 4
    else:
        operands = (xT,) + tuple(tables)
        tab_specs = [pl.BlockSpec((hsize, F), lambda i: (0, 0))
                     for _ in range(n_levels)]
        resident = n_levels * hsize * F * 4
        # TODO(synk): for instant-NGP-scale tables (hsize >= ~2**14) chunk the hash
        # axis (inner 'arbitrary' reduction into a VMEM accumulator) or gather the 8
        # corner rows instead of the one-hot matmul, and stream levels through a grid
        # axis so all tables need not be VMEM-resident (matters most on v7x 64MiB/TC).

    # resident tables (x2 buffers) + double-buffered x/out tiles + W working set
    working = (2 * 3 * tb + 2 * tb * n_levels * F + n_levels * hsize * tb) * 4
    limit = _vmem_limit_bytes(2 * resident + working)

    out = pl.pallas_call(
        kernel,
        out_shape=jax.ShapeDtypeStruct((Bp, n_levels * F), jnp.float32),
        grid=(n_tiles,),
        in_specs=[x_spec] + tab_specs,
        out_specs=out_spec,
        compiler_params=pltpu.CompilerParams(
            dimension_semantics=("parallel",),
            vmem_limit_bytes=limit),
    )(*operands)
    return out[:B] if Bp != B else out


# -------------------- pure-JAX reference (for verification) --------------------
def _reference_forward(x, tables, box_min, box_max, resolutions, log2_hashmap_size):
    box_min = jnp.asarray(box_min, jnp.float32)
    box_max = jnp.asarray(box_max, jnp.float32)
    mask = (1 << log2_hashmap_size) - 1
    offsets = jnp.asarray(BOX_OFFSETS, jnp.int32)          # (8, 3)
    outs = []
    for lvl, table in enumerate(tables):
        gs = (box_max - box_min) / jnp.float32(resolutions[lvl])
        xc = jnp.clip(x, box_min, box_max)
        bl = jnp.floor((xc - box_min) / gs).astype(jnp.int32)
        vmin = bl.astype(jnp.float32) * gs + box_min
        vmax = vmin + gs
        w = (xc - vmin) / (vmax - vmin)
        vidx = bl[:, None, :] + offsets[None, :, :]          # (B, 8, 3)
        h = ((vidx[..., 0] * 73856093)
             ^ (vidx[..., 1] * 19349663)
             ^ (vidx[..., 2] * 83492791)) & mask             # (B, 8)
        ve = table[h]                                        # (B, 8, F)
        w0 = w[:, 0][:, None]; w1 = w[:, 1][:, None]; w2 = w[:, 2][:, None]
        c00 = ve[:, 0] * (1 - w0) + ve[:, 4] * w0
        c01 = ve[:, 1] * (1 - w0) + ve[:, 5] * w0
        c10 = ve[:, 2] * (1 - w0) + ve[:, 6] * w0
        c11 = ve[:, 3] * (1 - w0) + ve[:, 7] * w0
        c0 = c00 * (1 - w1) + c10 * w1
        c1 = c01 * (1 - w1) + c11 * w1
        outs.append(c0 * (1 - w2) + c1 * w2)
    return jnp.concatenate(outs, axis=-1)


if __name__ == "__main__":
    # Small, deterministic configuration.
    n_levels = 2
    n_features = 32
    resolutions = [4, 8]            # floor(base_resolution * b**i), base=4, b=2
    log2_hashmap_size = 6           # 2**6 = 64 <= min(table sizes)
    box_min = np.array([-1.0, -1.0, -1.0], np.float32)
    box_max = np.array([1.0, 1.0, 1.0], np.float32)
    B = 512
    tb = 256

    key = jax.random.PRNGKey(0)
    kx, *ktabs = jax.random.split(key, 1 + n_levels)

    # sample points inside the bounding box
    x = jax.random.uniform(kx, (B, 3), jnp.float32, minval=-0.95, maxval=0.95)

    # nn.Embedding(resolution[i]**3, n_features), uniform(-1e-4, 1e-4)
    tables = [
        jax.random.uniform(ktabs[i], (resolutions[i] ** 3, n_features),
                           jnp.float32, minval=-1e-4, maxval=1e-4)
        for i in range(n_levels)
    ]

    ref = jax.block_until_ready(
        _reference_forward(x, tables, box_min, box_max, resolutions,
                           log2_hashmap_size))

    # 1) level-packed block-diagonal path (small tables)
    out_packed = jax.block_until_ready(
        grid_embedder_forward(x, tables, box_min, box_max, resolutions,
                              log2_hashmap_size, tb=tb, pack_levels=True))
    np.testing.assert_allclose(np.asarray(out_packed), np.asarray(ref),
                               rtol=1e-4, atol=1e-7)
    assert out_packed.shape == (B, n_levels * n_features)

    # 2) per-level matmul path (used when tables are large)
    out_per_level = jax.block_until_ready(
        grid_embedder_forward(x, tables, box_min, box_max, resolutions,
                              log2_hashmap_size, tb=tb, pack_levels=False))
    np.testing.assert_allclose(np.asarray(out_per_level), np.asarray(ref),
                               rtol=1e-4, atol=1e-7)

    # 3) ragged batch (exercises the padding path)
    Br = 400
    out_ragged = jax.block_until_ready(
        grid_embedder_forward(x[:Br], tables, box_min, box_max, resolutions,
                              log2_hashmap_size, tb=tb))
    np.testing.assert_allclose(np.asarray(out_ragged), np.asarray(ref)[:Br],
                               rtol=1e-4, atol=1e-7)

    print("KERNEL_OK")
</pallas_src>

<mosaic_0001>
module attributes {stable_mosaic.version = 11 : i64} {
  func.func @kernel(%arg0: i32, %arg1: memref<3x256xf32, #tpu.memory_space<vmem>>, %arg2: memref<128x64xf32, #tpu.memory_space<vmem>>, %arg3: memref<256x64xf32, #tpu.memory_space<vmem>>) attributes {dimension_semantics = [#tpu.dimension_semantics<parallel>], iteration_bounds = array<i64: 2>, scalar_prefetch = 0 : i64, scratch_operands = 0 : i64, tpu.core_type = #tpu.core_type<tc>, window_params = [{transform_indices = @transform_0, window_bounds = array<i64: 3, 256>}, {pipeline_mode = #tpu.pipeline_mode<synchronous>, transform_indices = @transform_1, window_bounds = array<i64: 128, 64>}, {transform_indices = @transform_2, window_bounds = array<i64: 256, 64>}]} {
    %c0 = arith.constant 0 : index
    %c0_0 = arith.constant 0 : index
    %0 = vector.load %arg1[%c0, %c0_0] : memref<3x256xf32, #tpu.memory_space<vmem>>, vector<3x256xf32>
    %1 = vector.extract_strided_slice %0 {offsets = [0, 0], sizes = [1, 256], strides = [1, 1]} : vector<3x256xf32> to vector<1x256xf32>
    %cst = arith.constant -1.000000e+00 : f32
    %cst_1 = arith.constant 1.000000e+00 : f32
    %2 = vector.broadcast %cst : f32 to vector<1x256xf32>
    %3 = arith.maximumf %2, %1 : vector<1x256xf32>
    %4 = vector.broadcast %cst_1 : f32 to vector<1x256xf32>
    %5 = arith.minimumf %4, %3 : vector<1x256xf32>
    %6 = vector.extract_strided_slice %0 {offsets = [1, 0], sizes = [1, 256], strides = [1, 1]} : vector<3x256xf32> to vector<1x256xf32>
    %cst_2 = arith.constant -1.000000e+00 : f32
    %cst_3 = arith.constant 1.000000e+00 : f32
    %7 = vector.broadcast %cst_2 : f32 to vector<1x256xf32>
    %8 = arith.maximumf %7, %6 : vector<1x256xf32>
    %9 = vector.broadcast %cst_3 : f32 to vector<1x256xf32>
    %10 = arith.minimumf %9, %8 : vector<1x256xf32>
    %11 = vector.extract_strided_slice %0 {offsets = [2, 0], sizes = [1, 256], strides = [1, 1]} : vector<3x256xf32> to vector<1x256xf32>
    %cst_4 = arith.constant -1.000000e+00 : f32
    %cst_5 = arith.constant 1.000000e+00 : f32
    %12 = vector.broadcast %cst_4 : f32 to vector<1x256xf32>
    %13 = arith.maximumf %12, %11 : vector<1x256xf32>
    %14 = vector.broadcast %cst_5 : f32 to vector<1x256xf32>
    %15 = arith.minimumf %14, %13 : vector<1x256xf32>
    %16 = tpu.iota {dimensions = array<i32: 0>} : vector<64x1xi32>
    %cst_6 = arith.constant -1.000000e+00 : f32
    %17 = vector.broadcast %cst_6 : f32 to vector<1x256xf32>
    %18 = arith.subf %5, %17 : vector<1x256xf32>
    %cst_7 = arith.constant 5.000000e-01 : f32
    %19 = vector.broadcast %cst_7 : f32 to vector<1x256xf32>
    %20 = arith.divf %18, %19 : vector<1x256xf32>
    %21 = math.floor %20 : vector<1x256xf32>
    %22 = arith.fptosi %21 : vector<1x256xf32> to vector<1x256xi32>
    %23 = arith.sitofp %22 : vector<1x256xi32> to vector<1x256xf32>
    %cst_8 = arith.constant 5.000000e-01 : f32
    %24 = vector.broadcast %cst_8 : f32 to vector<1x256xf32>
    %25 = arith.mulf %23, %24 : vector<1x256xf32>
    %cst_9 = arith.constant -1.000000e+00 : f32
    %26 = vector.broadcast %cst_9 : f32 to vector<1x256xf32>
    %27 = arith.addf %25, %26 : vector<1x256xf32>
    %cst_10 = arith.constant 5.000000e-01 : f32
    %28 = vector.broadcast %cst_10 : f32 to vector<1x256xf32>
    %29 = arith.addf %27, %28 : vector<1x256xf32>
    %30 = arith.subf %5, %27 : vector<1x256xf32>
    %31 = arith.subf %29, %27 : vector<1x256xf32>
    %32 = arith.divf %30, %31 : vector<1x256xf32>
    %c73856093_i32 = arith.constant 73856093 : i32
    %33 = vector.broadcast %c73856093_i32 : i32 to vector<1x256xi32>
    %34 = arith.muli %22, %33 : vector<1x256xi32>
    %c1_i32 = arith.constant 1 : i32
    %35 = vector.broadcast %c1_i32 : i32 to vector<1x256xi32>
    %36 = arith.addi %22, %35 : vector<1x256xi32>
    %c73856093_i32_11 = arith.constant 73856093 : i32
    %37 = vector.broadcast %c73856093_i32_11 : i32 to vector<1x256xi32>
    %38 = arith.muli %36, %37 : vector<1x256xi32>
    %cst_12 = arith.constant 1.000000e+00 : f32
    %39 = vector.broadcast %cst_12 : f32 to vector<1x256xf32>
    %40 = arith.subf %39, %32 : vector<1x256xf32>
    %cst_13 = arith.constant -1.000000e+00 : f32
    %41 = vector.broadcast %cst_13 : f32 to vector<1x256xf32>
    %42 = arith.subf %10, %41 : vector<1x256xf32>
    %cst_14 = arith.constant 5.000000e-01 : f32
    %43 = vector.broadcast %cst_14 : f32 to vector<1x256xf32>
    %44 = arith.divf %42, %43 : vector<1x256xf32>
    %45 = math.floor %44 : vector<1x256xf32>
    %46 = arith.fptosi %45 : vector<1x256xf32> to vector<1x256xi32>
    %47 = arith.sitofp %46 : vector<1x256xi32> to vector<1x256xf32>
    %cst_15 = arith.constant 5.000000e-01 : f32
    %48 = vector.broadcast %cst_15 : f32 to vector<1x256xf32>
    %49 = arith.mulf %47, %48 : vector<1x256xf32>
    %cst_16 = arith.constant -1.000000e+00 : f32
    %50 = vector.broadcast %cst_16 : f32 to vector<1x256xf32>
    %51 = arith.addf %49, %50 : vector<1x256xf32>
    %cst_17 = arith.constant 5.000000e-01 : f32
    %52 = vector.broadcast %cst_17 : f32 to vector<1x256xf32>
    %53 = arith.addf %51, %52 : vector<1x256xf32>
    %54 = arith.subf %10, %51 : vector<1x256xf32>
    %55 = arith.subf %53, %51 : vector<1x256xf32>
    %56 = arith.divf %54, %55 : vector<1x256xf32>
    %c19349663_i32 = arith.constant 19349663 : i32
    %57 = vector.broadcast %c19349663_i32 : i32 to vector<1x256xi32>
    %58 = arith.muli %46, %57 : vector<1x256xi32>
    %c1_i32_18 = arith.constant 1 : i32
    %59 = vector.broadcast %c1_i32_18 : i32 to vector<1x256xi32>
    %60 = arith.addi %46, %59 : vector<1x256xi32>
    %c19349663_i32_19 = arith.constant 19349663 : i32
    %61 = vector.broadcast %c19349663_i32_19 : i32 to vector<1x256xi32>
    %62 = arith.muli %60, %61 : vector<1x256xi32>
    %cst_20 = arith.constant 1.000000e+00 : f32
    %63 = vector.broadcast %cst_20 : f32 to vector<1x256xf32>
    %64 = arith.subf %63, %56 : vector<1x256xf32>
    %cst_21 = arith.constant -1.000000e+00 : f32
    %65 = vector.broadcast %cst_21 : f32 to vector<1x256xf32>
    %66 = arith.subf %15, %65 : vector<1x256xf32>
    %cst_22 = arith.constant 5.000000e-01 : f32
    %67 = vector.broadcast %cst_22 : f32 to vector<1x256xf32>
    %68 = arith.divf %66, %67 : vector<1x256xf32>
    %69 = math.floor %68 : vector<1x256xf32>
    %70 = arith.fptosi %69 : vector<1x256xf32> to vector<1x256xi32>
    %71 = arith.sitofp %70 : vector<1x256xi32> to vector<1x256xf32>
    %cst_23 = arith.constant 5.000000e-01 : f32
    %72 = vector.broadcast %cst_23 : f32 to vector<1x256xf32>
    %73 = arith.mulf %71, %72 : vector<1x256xf32>
    %cst_24 = arith.constant -1.000000e+00 : f32
    %74 = vector.broadcast %cst_24 : f32 to vector<1x256xf32>
    %75 = arith.addf %73, %74 : vector<1x256xf32>
    %cst_25 = arith.constant 5.000000e-01 : f32
    %76 = vector.broadcast %cst_25 : f32 to vector<1x256xf32>
    %77 = arith.addf %75, %76 : vector<1x256xf32>
    %78 = arith.subf %15, %75 : vector<1x256xf32>
    %79 = arith.subf %77, %75 : vector<1x256xf32>
    %80 = arith.divf %78, %79 : vector<1x256xf32>
    %c83492791_i32 = arith.constant 83492791 : i32
    %81 = vector.broadcast %c83492791_i32 : i32 to vector<1x256xi32>
    %82 = arith.muli %70, %81 : vector<1x256xi32>
    %c1_i32_26 = arith.constant 1 : i32
    %83 = vector.broadcast %c1_i32_26 : i32 to vector<1x256xi32>
    %84 = arith.addi %70, %83 : vector<1x256xi32>
    %c83492791_i32_27 = arith.constant 83492791 : i32
    %85 = vector.broadcast %c83492791_i32_27 : i32 to vector<1x256xi32>
    %86 = arith.muli %84, %85 : vector<1x256xi32>
    %cst_28 = arith.constant 1.000000e+00 : f32
    %87 = vector.broadcast %cst_28 : f32 to vector<1x256xf32>
    %88 = arith.subf %87, %80 : vector<1x256xf32>
    %89 = arith.xori %34, %58 : vector<1x256xi32>
    %90 = arith.xori %89, %82 : vector<1x256xi32>
    %c63_i32 = arith.constant 63 : i32
    %91 = vector.broadcast %c63_i32 : i32 to vector<1x256xi32>
    %92 = arith.andi %90, %91 : vector<1x256xi32>
    %93 = arith.mulf %40, %64 : vector<1x256xf32>
    %94 = arith.mulf %93, %88 : vector<1x256xf32>
    %95 = vector.broadcast %16 : vector<64x1xi32> to vector<64x256xi32>
    %96 = vector.broadcast %92 : vector<1x256xi32> to vector<64x256xi32>
    %97 = arith.cmpi eq, %95, %96 : vector<64x256xi32>
    %cst_29 = arith.constant 0.000000e+00 : f32
    %98 = vector.shape_cast %94 : vector<1x256xf32> to vector<1x256xf32>
    %99 = vector.broadcast %98 : vector<1x256xf32> to vector<64x256xf32>
    %100 = vector.broadcast %cst_29 : f32 to vector<64x256xf32>
    %101 = arith.select %97, %99, %100 : vector<64x256xi1>, vector<64x256xf32>
    %102 = arith.xori %34, %58 : vector<1x256xi32>
    %103 = arith.xori %102, %86 : vector<1x256xi32>
    %c63_i32_30 = arith.constant 63 : i32
    %104 = vector.broadcast %c63_i32_30 : i32 to vector<1x256xi32>
    %105 = arith.andi %103, %104 : vector<1x256xi32>
    %106 = arith.mulf %40, %64 : vector<1x256xf32>
    %107 = arith.mulf %106, %80 : vector<1x256xf32>
    %108 = vector.broadcast %16 : vector<64x1xi32> to vector<64x256xi32>
    %109 = vector.broadcast %105 : vector<1x256xi32> to vector<64x256xi32>
    %110 = arith.cmpi eq, %108, %109 : vector<64x256xi32>
    %cst_31 = arith.constant 0.000000e+00 : f32
    %111 = vector.shape_cast %107 : vector<1x256xf32> to vector<1x256xf32>
    %112 = vector.broadcast %111 : vector<1x256xf32> to vector<64x256xf32>
    %113 = vector.broadcast %cst_31 : f32 to vector<64x256xf32>
    %114 = arith.select %110, %112, %113 : vector<64x256xi1>, vector<64x256xf32>
    %115 = arith.addf %101, %114 : vector<64x256xf32>
    %116 = arith.xori %34, %62 : vector<1x256xi32>
    %117 = arith.xori %116, %82 : vector<1x256xi32>
    %c63_i32_32 = arith.constant 63 : i32
    %118 = vector.broadcast %c63_i32_32 : i32 to vector<1x256xi32>
    %119 = arith.andi %117, %118 : vector<1x256xi32>
    %120 = arith.mulf %40, %56 : vector<1x256xf32>
    %121 = arith.mulf %120, %88 : vector<1x256xf32>
    %122 = vector.broadcast %16 : vector<64x1xi32> to vector<64x256xi32>
    %123 = vector.broadcast %119 : vector<1x256xi32> to vector<64x256xi32>
    %124 = arith.cmpi eq, %122, %123 : vector<64x256xi32>
    %cst_33 = arith.constant 0.000000e+00 : f32
    %125 = vector.shape_cast %121 : vector<1x256xf32> to vector<1x256xf32>
    %126 = vector.broadcast %125 : vector<1x256xf32> to vector<64x256xf32>
    %127 = vector.broadcast %cst_33 : f32 to vector<64x256xf32>
    %128 = arith.select %124, %126, %127 : vector<64x256xi1>, vector<64x256xf32>
    %129 = arith.addf %115, %128 : vector<64x256xf32>
    %130 = arith.xori %34, %62 : vector<1x256xi32>
    %131 = arith.xori %130, %86 : vector<1x256xi32>
    %c63_i32_34 = arith.constant 63 : i32
    %132 = vector.broadcast %c63_i32_34 : i32 to vector<1x256xi32>
    %133 = arith.andi %131, %132 : vector<1x256xi32>
    %134 = arith.mulf %40, %56 : vector<1x256xf32>
    %135 = arith.mulf %134, %80 : vector<1x256xf32>
    %136 = vector.broadcast %16 : vector<64x1xi32> to vector<64x256xi32>
    %137 = vector.broadcast %133 : vector<1x256xi32> to vector<64x256xi32>
    %138 = arith.cmpi eq, %136, %137 : vector<64x256xi32>
    %cst_35 = arith.constant 0.000000e+00 : f32
    %139 = vector.shape_cast %135 : vector<1x256xf32> to vector<1x256xf32>
    %140 = vector.broadcast %139 : vector<1x256xf32> to vector<64x256xf32>
    %141 = vector.broadcast %cst_35 : f32 to vector<64x256xf32>
    %142 = arith.select %138, %140, %141 : vector<64x256xi1>, vector<64x256xf32>
    %143 = arith.addf %129, %142 : vector<64x256xf32>
    %144 = arith.xori %38, %58 : vector<1x256xi32>
    %145 = arith.xori %144, %82 : vector<1x256xi32>
    %c63_i32_36 = arith.constant 63 : i32
    %146 = vector.broadcast %c63_i32_36 : i32 to vector<1x256xi32>
    %147 = arith.andi %145, %146 : vector<1x256xi32>
    %148 = arith.mulf %32, %64 : vector<1x256xf32>
    %149 = arith.mulf %148, %88 : vector<1x256xf32>
    %150 = vector.broadcast %16 : vector<64x1xi32> to vector<64x256xi32>
    %151 = vector.broadcast %147 : vector<1x256xi32> to vector<64x256xi32>
    %152 = arith.cmpi eq, %150, %151 : vector<64x256xi32>
    %cst_37 = arith.constant 0.000000e+00 : f32
    %153 = vector.shape_cast %149 : vector<1x256xf32> to vector<1x256xf32>
    %154 = vector.broadcast %153 : vector<1x256xf32> to vector<64x256xf32>
    %155 = vector.broadcast %cst_37 : f32 to vector<64x256xf32>
    %156 = arith.select %152, %154, %155 : vector<64x256xi1>, vector<64x256xf32>
    %157 = arith.addf %143, %156 : vector<64x256xf32>
    %158 = arith.xori %38, %58 : vector<1x256xi32>
    %159 = arith.xori %158, %86 : vector<1x256xi32>
    %c63_i32_38 = arith.constant 63 : i32
    %160 = vector.broadcast %c63_i32_38 : i32 to vector<1x256xi32>
    %161 = arith.andi %159, %160 : vector<1x256xi32>
    %162 = arith.mulf %32, %64 : vector<1x256xf32>
    %163 = arith.mulf %162, %80 : vector<1x256xf32>
    %164 = vector.broadcast %16 : vector<64x1xi32> to vector<64x256xi32>
    %165 = vector.broadcast %161 : vector<1x256xi32> to vector<64x256xi32>
    %166 = arith.cmpi eq, %164, %165 : vector<64x256xi32>
    %cst_39 = arith.constant 0.000000e+00 : f32
    %167 = vector.shape_cast %163 : vector<1x256xf32> to vector<1x256xf32>
    %168 = vector.broadcast %167 : vector<1x256xf32> to vector<64x256xf32>
    %169 = vector.broadcast %cst_39 : f32 to vector<64x256xf32>
    %170 = arith.select %166, %168, %169 : vector<64x256xi1>, vector<64x256xf32>
    %171 = arith.addf %157, %170 : vector<64x256xf32>
    %172 = arith.xori %38, %62 : vector<1x256xi32>
    %173 = arith.xori %172, %82 : vector<1x256xi32>
    %c63_i32_40 = arith.constant 63 : i32
    %174 = vector.broadcast %c63_i32_40 : i32 to vector<1x256xi32>
    %175 = arith.andi %173, %174 : vector<1x256xi32>
    %176 = arith.mulf %32, %56 : vector<1x256xf32>
    %177 = arith.mulf %176, %88 : vector<1x256xf32>
    %178 = vector.broadcast %16 : vector<64x1xi32> to vector<64x256xi32>
    %179 = vector.broadcast %175 : vector<1x256xi32> to vector<64x256xi32>
    %180 = arith.cmpi eq, %178, %179 : vector<64x256xi32>
    %cst_41 = arith.constant 0.000000e+00 : f32
    %181 = vector.shape_cast %177 : vector<1x256xf32> to vector<1x256xf32>
    %182 = vector.broadcast %181 : vector<1x256xf32> to vector<64x256xf32>
    %183 = vector.broadcast %cst_41 : f32 to vector<64x256xf32>
    %184 = arith.select %180, %182, %183 : vector<64x256xi1>, vector<64x256xf32>
    %185 = arith.addf %171, %184 : vector<64x256xf32>
    %186 = arith.xori %38, %62 : vector<1x256xi32>
    %187 = arith.xori %186, %86 : vector<1x256xi32>
    %c63_i32_42 = arith.constant 63 : i32
    %188 = vector.broadcast %c63_i32_42 : i32 to vector<1x256xi32>
    %189 = arith.andi %187, %188 : vector<1x256xi32>
    %190 = arith.mulf %32, %56 : vector<1x256xf32>
    %191 = arith.mulf %190, %80 : vector<1x256xf32>
    %192 = vector.broadcast %16 : vector<64x1xi32> to vector<64x256xi32>
    %193 = vector.broadcast %189 : vector<1x256xi32> to vector<64x256xi32>
    %194 = arith.cmpi eq, %192, %193 : vector<64x256xi32>
    %cst_43 = arith.constant 0.000000e+00 : f32
    %195 = vector.shape_cast %191 : vector<1x256xf32> to vector<1x256xf32>
    %196 = vector.broadcast %195 : vector<1x256xf32> to vector<64x256xf32>
    %197 = vector.broadcast %cst_43 : f32 to vector<64x256xf32>
    %198 = arith.select %194, %196, %197 : vector<64x256xi1>, vector<64x256xf32>
    %199 = arith.addf %185, %198 : vector<64x256xf32>
    %cst_44 = arith.constant -1.000000e+00 : f32
    %200 = vector.broadcast %cst_44 : f32 to vector<1x256xf32>
    %201 = arith.subf %5, %200 : vector<1x256xf32>
    %cst_45 = arith.constant 2.500000e-01 : f32
    %202 = vector.broadcast %cst_45 : f32 to vector<1x256xf32>
    %203 = arith.divf %201, %202 : vector<1x256xf32>
    %204 = math.floor %203 : vector<1x256xf32>
    %205 = arith.fptosi %204 : vector<1x256xf32> to vector<1x256xi32>
    %206 = arith.sitofp %205 : vector<1x256xi32> to vector<1x256xf32>
    %cst_46 = arith.constant 2.500000e-01 : f32
    %207 = vector.broadcast %cst_46 : f32 to vector<1x256xf32>
    %208 = arith.mulf %206, %207 : vector<1x256xf32>
    %cst_47 = arith.constant -1.000000e+00 : f32
    %209 = vector.broadcast %cst_47 : f32 to vector<1x256xf32>
    %210 = arith.addf %208, %209 : vector<1x256xf32>
    %cst_48 = arith.constant 2.500000e-01 : f32
    %211 = vector.broadcast %cst_48 : f32 to vector<1x256xf32>
    %212 = arith.addf %210, %211 : vector<1x256xf32>
    %213 = arith.subf %5, %210 : vector<1x256xf32>
    %214 = arith.subf %212, %210 : vector<1x256xf32>
    %215 = arith.divf %213, %214 : vector<1x256xf32>
    %c73856093_i32_49 = arith.constant 73856093 : i32
    %216 = vector.broadcast %c73856093_i32_49 : i32 to vector<1x256xi32>
    %217 = arith.muli %205, %216 : vector<1x256xi32>
    %c1_i32_50 = arith.constant 1 : i32
    %218 = vector.broadcast %c1_i32_50 : i32 to vector<1x256xi32>
    %219 = arith.addi %205, %218 : vector<1x256xi32>
    %c73856093_i32_51 = arith.constant 73856093 : i32
    %220 = vector.broadcast %c73856093_i32_51 : i32 to vector<1x256xi32>
    %221 = arith.muli %219, %220 : vector<1x256xi32>
    %cst_52 = arith.constant 1.000000e+00 : f32
    %222 = vector.broadcast %cst_52 : f32 to vector<1x256xf32>
    %223 = arith.subf %222, %215 : vector<1x256xf32>
    %cst_53 = arith.constant -1.000000e+00 : f32
    %224 = vector.broadcast %cst_53 : f32 to vector<1x256xf32>
    %225 = arith.subf %10, %224 : vector<1x256xf32>
    %cst_54 = arith.constant 2.500000e-01 : f32
    %226 = vector.broadcast %cst_54 : f32 to vector<1x256xf32>
    %227 = arith.divf %225, %226 : vector<1x256xf32>
    %228 = math.floor %227 : vector<1x256xf32>
    %229 = arith.fptosi %228 : vector<1x256xf32> to vector<1x256xi32>
    %230 = arith.sitofp %229 : vector<1x256xi32> to vector<1x256xf32>
    %cst_55 = arith.constant 2.500000e-01 : f32
    %231 = vector.broadcast %cst_55 : f32 to vector<1x256xf32>
    %232 = arith.mulf %230, %231 : vector<1x256xf32>
    %cst_56 = arith.constant -1.000000e+00 : f32
    %233 = vector.broadcast %cst_56 : f32 to vector<1x256xf32>
    %234 = arith.addf %232, %233 : vector<1x256xf32>
    %cst_57 = arith.constant 2.500000e-01 : f32
    %235 = vector.broadcast %cst_57 : f32 to vector<1x256xf32>
    %236 = arith.addf %234, %235 : vector<1x256xf32>
    %237 = arith.subf %10, %234 : vector<1x256xf32>
    %238 = arith.subf %236, %234 : vector<1x256xf32>
    %239 = arith.divf %237, %238 : vector<1x256xf32>
    %c19349663_i32_58 = arith.constant 19349663 : i32
    %240 = vector.broadcast %c19349663_i32_58 : i32 to vector<1x256xi32>
    %241 = arith.muli %229, %240 : vector<1x256xi32>
    %c1_i32_59 = arith.constant 1 : i32
    %242 = vector.broadcast %c1_i32_59 : i32 to vector<1x256xi32>
    %243 = arith.addi %229, %242 : vector<1x256xi32>
    %c19349663_i32_60 = arith.constant 19349663 : i32
    %244 = vector.broadcast %c19349663_i32_60 : i32 to vector<1x256xi32>
    %245 = arith.muli %243, %244 : vector<1x256xi32>
    %cst_61 = arith.constant 1.000000e+00 : f32
    %246 = vector.broadcast %cst_61 : f32 to vector<1x256xf32>
    %247 = arith.subf %246, %239 : vector<1x256xf32>
    %cst_62 = arith.constant -1.000000e+00 : f32
    %248 = vector.broadcast %cst_62 : f32 to vector<1x256xf32>
    %249 = arith.subf %15, %248 : vector<1x256xf32>
    %cst_63 = arith.constant 2.500000e-01 : f32
    %250 = vector.broadcast %cst_63 : f32 to vector<1x256xf32>
    %251 = arith.divf %249, %250 : vector<1x256xf32>
    %252 = math.floor %251 : vector<1x256xf32>
    %253 = arith.fptosi %252 : vector<1x256xf32> to vector<1x256xi32>
    %254 = arith.sitofp %253 : vector<1x256xi32> to vector<1x256xf32>
    %cst_64 = arith.constant 2.500000e-01 : f32
    %255 = vector.broadcast %cst_64 : f32 to vector<1x256xf32>
    %256 = arith.mulf %254, %255 : vector<1x256xf32>
    %cst_65 = arith.constant -1.000000e+00 : f32
    %257 = vector.broadcast %cst_65 : f32 to vector<1x256xf32>
    %258 = arith.addf %256, %257 : vector<1x256xf32>
    %cst_66 = arith.constant 2.500000e-01 : f32
    %259 = vector.broadcast %cst_66 : f32 to vector<1x256xf32>
    %260 = arith.addf %258, %259 : vector<1x256xf32>
    %261 = arith.subf %15, %258 : vector<1x256xf32>
    %262 = arith.subf %260, %258 : vector<1x256xf32>
    %263 = arith.divf %261, %262 : vector<1x256xf32>
    %c83492791_i32_67 = arith.constant 83492791 : i32
    %264 = vector.broadcast %c83492791_i32_67 : i32 to vector<1x256xi32>
    %265 = arith.muli %253, %264 : vector<1x256xi32>
    %c1_i32_68 = arith.constant 1 : i32
    %266 = vector.broadcast %c1_i32_68 : i32 to vector<1x256xi32>
    %267 = arith.addi %253, %266 : vector<1x256xi32>
    %c83492791_i32_69 = arith.constant 83492791 : i32
    %268 = vector.broadcast %c83492791_i32_69 : i32 to vector<1x256xi32>
    %269 = arith.muli %267, %268 : vector<1x256xi32>
    %cst_70 = arith.constant 1.000000e+00 : f32
    %270 = vector.broadcast %cst_70 : f32 to vector<1x256xf32>
    %271 = arith.subf %270, %263 : vector<1x256xf32>
    %272 = arith.xori %217, %241 : vector<1x256xi32>
    %273 = arith.xori %272, %265 : vector<1x256xi32>
    %c63_i32_71 = arith.constant 63 : i32
    %274 = vector.broadcast %c63_i32_71 : i32 to vector<1x256xi32>
    %275 = arith.andi %273, %274 : vector<1x256xi32>
    %276 = arith.mulf %223, %247 : vector<1x256xf32>
    %277 = arith.mulf %276, %271 : vector<1x256xf32>
    %278 = vector.broadcast %16 : vector<64x1xi32> to vector<64x256xi32>
    %279 = vector.broadcast %275 : vector<1x256xi32> to vector<64x256xi32>
    %280 = arith.cmpi eq, %278, %279 : vector<64x256xi32>
    %cst_72 = arith.constant 0.000000e+00 : f32
    %281 = vector.shape_cast %277 : vector<1x256xf32> to vector<1x256xf32>
    %282 = vector.broadcast %281 : vector<1x256xf32> to vector<64x256xf32>
    %283 = vector.broadcast %cst_72 : f32 to vector<64x256xf32>
    %284 = arith.select %280, %282, %283 : vector<64x256xi1>, vector<64x256xf32>
    %285 = arith.xori %217, %241 : vector<1x256xi32>
    %286 = arith.xori %285, %269 : vector<1x256xi32>
    %c63_i32_73 = arith.constant 63 : i32
    %287 = vector.broadcast %c63_i32_73 : i32 to vector<1x256xi32>
    %288 = arith.andi %286, %287 : vector<1x256xi32>
    %289 = arith.mulf %223, %247 : vector<1x256xf32>
    %290 = arith.mulf %289, %263 : vector<1x256xf32>
    %291 = vector.broadcast %16 : vector<64x1xi32> to vector<64x256xi32>
    %292 = vector.broadcast %288 : vector<1x256xi32> to vector<64x256xi32>
    %293 = arith.cmpi eq, %291, %292 : vector<64x256xi32>
    %cst_74 = arith.constant 0.000000e+00 : f32
    %294 = vector.shape_cast %290 : vector<1x256xf32> to vector<1x256xf32>
    %295 = vector.broadcast %294 : vector<1x256xf32> to vector<64x256xf32>
    %296 = vector.broadcast %cst_74 : f32 to vector<64x256xf32>
    %297 = arith.select %293, %295, %296 : vector<64x256xi1>, vector<64x256xf32>
    %298 = arith.addf %284, %297 : vector<64x256xf32>
    %299 = arith.xori %217, %245 : vector<1x256xi32>
    %300 = arith.xori %299, %265 : vector<1x256xi32>
    %c63_i32_75 = arith.constant 63 : i32
    %301 = vector.broadcast %c63_i32_75 : i32 to vector<1x256xi32>
    %302 = arith.andi %300, %301 : vector<1x256xi32>
    %303 = arith.mulf %223, %239 : vector<1x256xf32>
    %304 = arith.mulf %303, %271 : vector<1x256xf32>
    %305 = vector.broadcast %16 : vector<64x1xi32> to vector<64x256xi32>
    %306 = vector.broadcast %302 : vector<1x256xi32> to vector<64x256xi32>
    %307 = arith.cmpi eq, %305, %306 : vector<64x256xi32>
    %cst_76 = arith.constant 0.000000e+00 : f32
    %308 = vector.shape_cast %304 : vector<1x256xf32> to vector<1x256xf32>
    %309 = vector.broadcast %308 : vector<1x256xf32> to vector<64x256xf32>
    %310 = vector.broadcast %cst_76 : f32 to vector<64x256xf32>
    %311 = arith.select %307, %309, %310 : vector<64x256xi1>, vector<64x256xf32>
    %312 = arith.addf %298, %311 : vector<64x256xf32>
    %313 = arith.xori %217, %245 : vector<1x256xi32>
    %314 = arith.xori %313, %269 : vector<1x256xi32>
    %c63_i32_77 = arith.constant 63 : i32
    %315 = vector.broadcast %c63_i32_77 : i32 to vector<1x256xi32>
    %316 = arith.andi %314, %315 : vector<1x256xi32>
    %317 = arith.mulf %223, %239 : vector<1x256xf32>
    %318 = arith.mulf %317, %263 : vector<1x256xf32>
    %319 = vector.broadcast %16 : vector<64x1xi32> to vector<64x256xi32>
    %320 = vector.broadcast %316 : vector<1x256xi32> to vector<64x256xi32>
    %321 = arith.cmpi eq, %319, %320 : vector<64x256xi32>
    %cst_78 = arith.constant 0.000000e+00 : f32
    %322 = vector.shape_cast %318 : vector<1x256xf32> to vector<1x256xf32>
    %323 = vector.broadcast %322 : vector<1x256xf32> to vector<64x256xf32>
    %324 = vector.broadcast %cst_78 : f32 to vector<64x256xf32>
    %325 = arith.select %321, %323, %324 : vector<64x256xi1>, vector<64x256xf32>
    %326 = arith.addf %312, %325 : vector<64x256xf32>
    %327 = arith.xori %221, %241 : vector<1x256xi32>
    %328 = arith.xori %327, %265 : vector<1x256xi32>
    %c63_i32_79 = arith.constant 63 : i32
    %329 = vector.broadcast %c63_i32_79 : i32 to vector<1x256xi32>
    %330 = arith.andi %328, %329 : vector<1x256xi32>
    %331 = arith.mulf %215, %247 : vector<1x256xf32>
    %332 = arith.mulf %331, %271 : vector<1x256xf32>
    %333 = vector.broadcast %16 : vector<64x1xi32> to vector<64x256xi32>
    %334 = vector.broadcast %330 : vector<1x256xi32> to vector<64x256xi32>
    %335 = arith.cmpi eq, %333, %334 : vector<64x256xi32>
    %cst_80 = arith.constant 0.000000e+00 : f32
    %336 = vector.shape_cast %332 : vector<1x256xf32> to vector<1x256xf32>
    %337 = vector.broadcast %336 : vector<1x256xf32> to vector<64x256xf32>
    %338 = vector.broadcast %cst_80 : f32 to vector<64x256xf32>
    %339 = arith.select %335, %337, %338 : vector<64x256xi1>, vector<64x256xf32>
    %340 = arith.addf %326, %339 : vector<64x256xf32>
    %341 = arith.xori %221, %241 : vector<1x256xi32>
    %342 = arith.xori %341, %269 : vector<1x256xi32>
    %c63_i32_81 = arith.constant 63 : i32
    %343 = vector.broadcast %c63_i32_81 : i32 to vector<1x256xi32>
    %344 = arith.andi %342, %343 : vector<1x256xi32>
    %345 = arith.mulf %215, %247 : vector<1x256xf32>
    %346 = arith.mulf %345, %263 : vector<1x256xf32>
    %347 = vector.broadcast %16 : vector<64x1xi32> to vector<64x256xi32>
    %348 = vector.broadcast %344 : vector<1x256xi32> to vector<64x256xi32>
    %349 = arith.cmpi eq, %347, %348 : vector<64x256xi32>
    %cst_82 = arith.constant 0.000000e+00 : f32
    %350 = vector.shape_cast %346 : vector<1x256xf32> to vector<1x256xf32>
    %351 = vector.broadcast %350 : vector<1x256xf32> to vector<64x256xf32>
    %352 = vector.broadcast %cst_82 : f32 to vector<64x256xf32>
    %353 = arith.select %349, %351, %352 : vector<64x256xi1>, vector<64x256xf32>
    %354 = arith.addf %340, %353 : vector<64x256xf32>
    %355 = arith.xori %221, %245 : vector<1x256xi32>
    %356 = arith.xori %355, %265 : vector<1x256xi32>
    %c63_i32_83 = arith.constant 63 : i32
    %357 = vector.broadcast %c63_i32_83 : i32 to vector<1x256xi32>
    %358 = arith.andi %356, %357 : vector<1x256xi32>
    %359 = arith.mulf %215, %239 : vector<1x256xf32>
    %360 = arith.mulf %359, %271 : vector<1x256xf32>
    %361 = vector.broadcast %16 : vector<64x1xi32> to vector<64x256xi32>
    %362 = vector.broadcast %358 : vector<1x256xi32> to vector<64x256xi32>
    %363 = arith.cmpi eq, %361, %362 : vector<64x256xi32>
    %cst_84 = arith.constant 0.000000e+00 : f32
    %364 = vector.shape_cast %360 : vector<1x256xf32> to vector<1x256xf32>
    %365 = vector.broadcast %364 : vector<1x256xf32> to vector<64x256xf32>
    %366 = vector.broadcast %cst_84 : f32 to vector<64x256xf32>
    %367 = arith.select %363, %365, %366 : vector<64x256xi1>, vector<64x256xf32>
    %368 = arith.addf %354, %367 : vector<64x256xf32>
    %369 = arith.xori %221, %245 : vector<1x256xi32>
    %370 = arith.xori %369, %269 : vector<1x256xi32>
    %c63_i32_85 = arith.constant 63 : i32
    %371 = vector.broadcast %c63_i32_85 : i32 to vector<1x256xi32>
    %372 = arith.andi %370, %371 : vector<1x256xi32>
    %373 = arith.mulf %215, %239 : vector<1x256xf32>
    %374 = arith.mulf %373, %263 : vector<1x256xf32>
    %375 = vector.broadcast %16 : vector<64x1xi32> to vector<64x256xi32>
    %376 = vector.broadcast %372 : vector<1x256xi32> to vector<64x256xi32>
    %377 = arith.cmpi eq, %375, %376 : vector<64x256xi32>
    %cst_86 = arith.constant 0.000000e+00 : f32
    %378 = vector.shape_cast %374 : vector<1x256xf32> to vector<1x256xf32>
    %379 = vector.broadcast %378 : vector<1x256xf32> to vector<64x256xf32>
    %380 = vector.broadcast %cst_86 : f32 to vector<64x256xf32>
    %381 = arith.select %377, %379, %380 : vector<64x256xi1>, vector<64x256xf32>
    %382 = arith.addf %368, %381 : vector<64x256xf32>
    %383 = tpu.concatenate %199, %382 in 0 : vector<64x256xf32>, vector<64x256xf32> -> vector<128x256xf32>
    %c0_87 = arith.constant 0 : index
    %c0_88 = arith.constant 0 : index
    %384 = vector.load %arg2[%c0_87, %c0_88] : memref<128x64xf32, #tpu.memory_space<vmem>>, vector<128x64xf32>
    %cst_89 = arith.constant dense<0.000000e+00> : vector<256x64xf32>
    %385 = tpu.matmul %383, %384, %cst_89 {dimension_numbers = #tpu.dot_dimension_numbers<[0], [0], [1], [1], [0, 1, 1, 1], [], []>} : vector<128x256xf32>, vector<128x64xf32>, vector<256x64xf32> -> vector<256x64xf32>
    %c0_90 = arith.constant 0 : index
    %c0_91 = arith.constant 0 : index
    %386 = vector.load %arg3[%c0_90, %c0_91] : memref<256x64xf32, #tpu.memory_space<vmem>>, vector<256x64xf32>
    tpu.vector_store %arg3[%c0_90, %c0_91], %385 {strides = array<i32>} : memref<256x64xf32, #tpu.memory_space<vmem>>, vector<256x64xf32>,
    return
  }
  func.func @transform_0(%arg0: i32) -> (i32, i32) {
    %c0_i32 = arith.constant 0 : i32
    %c0_i32_0 = arith.constant 0 : i32
    return %c0_i32, %arg0 : i32, i32
  }
  func.func @transform_1(%arg0: i32) -> (i32, i32) {
    %c0_i32 = arith.constant 0 : i32
    %c0_i32_0 = arith.constant 0 : i32
    %c0_i32_1 = arith.constant 0 : i32
    return %c0_i32, %c0_i32_0 : i32, i32
  }
  func.func @transform_2(%arg0: i32) -> (i32, i32) {
    %c0_i32 = arith.constant 0 : i32
    %c0_i32_0 = arith.constant 0 : i32
    return %arg0, %c0_i32 : i32, i32
  }
}

</mosaic_0001>

<llo_original>
// kernel: tpu_custom_call.1
$region0: #{tpu_custom_call.1}
  #allocation0 [shape = 'u32[]', space=smem, size = 0x4, offset = 0x4, fixed_abs, tag = 'smem constant byte address 0x4 - core index']
  #allocation1 [shape = 'u32[72,128]{1,0:T(1,128)}', space=vmem, size = 0x9000, scoped, tag = 'internal scratch']
  %s0 = inlined_call_operand.vmem [shape: f32[3,512], index: 0, kind: input, shape index: {}]
  %s1 = inlined_call_operand.vmem [shape: f32[128,64], index: 1, kind: input, shape index: {}]
  %s2 = inlined_call_operand.vmem [shape: f32[512,64], index: 2, kind: output, shape index: {}]
  %s3 = sld [smem:[#allocation0]]
  $region41: #{tpu_custom_call.1} parent=0
    _
  %s5 = ssub.s32 1, %s3
  %s6 = scalar_select 0, %s5, %s3
  loop: start=0, step=1, limit=4
  $region2: #{tpu_custom_call.1} parent=0 // loop_pre_header
    _
  $region3: #{tpu_custom_call.1} parent=0 // loop_header
    %s8 = sphi 0, %s12
    %p9 = scmp.ge.s32.totalorder %s8, 4
    %s18 = sphi 0, %s20
    %s21 = sphi 0, %s18
    %s22 = sphi 0, %s21
    %s38 = sphi 0, %s22
    %s42 = sphi 0, %s42
    %s44 = sphi 0, %s42
    %s45 = sphi 0, %s44
    %s59 = sphi 0, %s45
    %s65 = sphi 0, %s67
    %s68 = sphi 0, %s65
    %s69 = sphi 0, %s68
    %s85 = sphi 0, %s69
  $region4: #{tpu_custom_call.1} parent=0 // loop_header_branch
    %11 = sbr.rel (%p9) target = $region8
  $region5: #{tpu_custom_call.1} parent=0 // loop_body
    %s13 = ssub.s32 %s8, 1
    %s14 = ssub.s32 %s8, 2
    %s15 = sadd.s32 %s8, 1
    %s16 = ssub.s32 %s8, %s15
    %p17 = scmp.eq.s32.totalorder %s16, 0
    %s19 = sadd.s32 %s18, 1
    %s20 = scalar_select %p17, %s18, %s19
    %p23 = pneg %p17
    %p24 = scmp.eq.s32.totalorder %s8, 1
    %p25 = por %p23, %p24
    %p26 = scmp.ne.s32.totalorder %s18, %s21
    %p27 = scmp.eq.s32.totalorder %s8, 0
    %p28 = por %p26, %p27
    %p29 = scmp.ne.s32.totalorder %s18, %s21
    %p30 = scmp.eq.s32.totalorder %s13, 1
    %p31 = por %p29, %p30
    %p32 = scmp.ne.s32.totalorder %s21, %s22
    %p33 = scmp.eq.s32.totalorder %s13, 0
    %p34 = por %p32, %p33
    %p35 = scmp.ne.s32.totalorder %s21, %s22
    %p36 = scmp.eq.s32.totalorder %s14, 1
    %p37 = por %p35, %p36
    %p39 = scmp.ne.s32.totalorder %s22, %s38
    %p40 = scmp.eq.s32.totalorder %s14, 0
    %p41 = por %p39, %p40
    %s43 = sadd.s32 %s42, 1
    %p46 = scmp.eq.s32.totalorder %s8, 1
    %p47 = scmp.ne.s32.totalorder %s42, %s44
    %p48 = scmp.eq.s32.totalorder %s8, 0
    %p49 = por %p47, %p48
    %p50 = scmp.ne.s32.totalorder %s42, %s44
    %p51 = scmp.eq.s32.totalorder %s13, 1
    %p52 = por %p50, %p51
    %p53 = scmp.ne.s32.totalorder %s44, %s45
    %p54 = scmp.eq.s32.totalorder %s13, 0
    %p55 = por %p53, %p54
    %p56 = scmp.ne.s32.totalorder %s44, %s45
    %p57 = scmp.eq.s32.totalorder %s14, 1
    %p58 = por %p56, %p57
    %p60 = scmp.ne.s32.totalorder %s45, %s59
    %p61 = scmp.eq.s32.totalorder %s14, 0
    %p62 = por %p60, %p61
    %s63 = ssub.s32 %s8, %s15
    %p64 = scmp.eq.s32.totalorder %s63, 0
    %s66 = sadd.s32 %s65, 1
    %s67 = scalar_select %p64, %s65, %s66
    %p70 = pneg %p64
    %p71 = scmp.eq.s32.totalorder %s8, 1
    %p72 = por %p70, %p71
    %p73 = scmp.ne.s32.totalorder %s65, %s68
    %p74 = scmp.eq.s32.totalorder %s8, 0
    %p75 = por %p73, %p74
    %p76 = scmp.ne.s32.totalorder %s65, %s68
    %p77 = scmp.eq.s32.totalorder %s13, 1
    %p78 = por %p76, %p77
    %p79 = scmp.ne.s32.totalorder %s68, %s69
    %p80 = scmp.eq.s32.totalorder %s13, 0
    %p81 = por %p79, %p80
    %p82 = scmp.ne.s32.totalorder %s68, %s69
    %p83 = scmp.eq.s32.totalorder %s14, 1
    %p84 = por %p82, %p83
    %p86 = scmp.ne.s32.totalorder %s69, %s85
    %p87 = scmp.eq.s32.totalorder %s14, 0
    %p88 = por %p86, %p87
    %p89 = scmp.le.s32.totalorder 1, %s8
    %p90 = scmp.lt.s32.totalorder %s8, 3
    %p91 = pnand %p89, %p90
    %p92 = pneg %p91
    // Predicated region
    $region9: #{tpu_custom_call.1} parent=5 // pred_check
      _
    $region10: #{tpu_custom_call.1} parent=5 // pred_check_branch
      %94 = sbr.rel (%p91) target = $region12
    $region11: #{tpu_custom_call.1} parent=5 // pred_region
      %s95 = ssub.s32 %s8, 1
      // Predicated region
      $region13: #{tpu_custom_call.1} parent=11 // pred_check
        %p96 = pneg %p55
      $region14: #{tpu_custom_call.1} parent=11 // pred_check_branch
        %98 = sbr.rel (%p96) target = $region16
      $region15: #{tpu_custom_call.1} parent=11 // pred_region
        _
      $region16: #{tpu_custom_call.1} parent=11 // pred_fallthru
        _
    $region12: #{tpu_custom_call.1} parent=5 // pred_fallthru
      _
    %p99 = scmp.lt.s32.totalorder %s8, 2
    // Predicated region
    $region17: #{tpu_custom_call.1} parent=5 // pred_check
      %p100 = pneg %p99
    $region18: #{tpu_custom_call.1} parent=5 // pred_check_branch
      %102 = sbr.rel (%p100) target = $region20
    $region19: #{tpu_custom_call.1} parent=5 // pred_region
      // Predicated region
      $region21: #{tpu_custom_call.1} parent=19 // pred_check
        %p103 = pneg %p28
      $region22: #{tpu_custom_call.1} parent=19 // pred_check_branch
        %105 = sbr.rel (%p103) target = $region24
      $region23: #{tpu_custom_call.1} parent=19 // pred_region
        %s106 = smul.u32 2, %s8
        %p107 = scmp.lt.s32.totalorder %s106, 3
        %s108 = scalar_select %p107, %s106, 3
        %s109 = smul.addr %s108, 4
        %s110 = scalar_lea.vmem %s0, %s109
        %s111 = smul.u32 2, %s8
      $region24: #{tpu_custom_call.1} parent=19 // pred_fallthru
        _
    $region20: #{tpu_custom_call.1} parent=5 // pred_fallthru
      _
    %p112 = scmp.le.s32.totalorder 1, %s8
    %p113 = scmp.lt.s32.totalorder %s8, 3
    %p114 = pnand %p112, %p113
    %p115 = pneg %p114
    // Predicated region
    $region25: #{tpu_custom_call.1} parent=5 // pred_check
      _
    $region26: #{tpu_custom_call.1} parent=5 // pred_check_branch
      %117 = sbr.rel (%p114) target = $region28
    $region27: #{tpu_custom_call.1} parent=5 // pred_region
      %s118 = ssub.s32 %s8, 1
      %s119 = smul.u32 2, %s13
      %p120 = scmp.lt.s32.totalorder %s119, 3
      %s121 = scalar_select %p120, %s119, 3
      %s122 = smul.addr %s121, 4
      %s123 = scalar_lea.vmem %s0, %s122
      %p124 = pneg %p34
      %p125 = pneg %p31
      %p126 = pneg %p55
      %p127 = pneg %p52
      %p128 = pneg %p81
      %p129 = pneg %p78
      %s130 = smul.u32 32, %s13
      %p131 = scmp.lt.s32.totalorder %s130, 63
      %s132 = scalar_select %p131, %s130, 63
      %s133 = smul.addr %s132, 8
      %s134 = scalar_lea.vmem %s2, %s133
      %s135 = smul.u32 2, %s13
      %p136 = scmp.lt.s32.totalorder %s135, 3
      %s137 = scalar_select %p136, %s135, 3
      %s138 = smul.addr %s137, 4
      %s139 = scalar_lea.vmem %s0, %s138
      %s140 = smul.u32 2, %s13
      %s141 = smul.u32 32, %s13
      %p142 = scmp.lt.s32.totalorder %s141, 63
      %s143 = scalar_select %p142, %s141, 63
      %s144 = smul.addr %s143, 8
      %s145 = scalar_lea.vmem %s2, %s144
      %s146 = smul.u32 32, %s13
      %v147 = vld [vmem:[%s139] sm:$0x77]
      %v148 = vmax.f32 %v147, -1.0
      %v149 = vmin.f32 %v148, 1.0
      %v150 = vlaneseq
      %v151 = vshrl.u32 %v150, 7
      %v152 = vadd.s32 %v151, 8
      %v153 = vadd.s32 %v151, 16
      %v154 = vadd.s32 %v151, 24
      %v155 = vadd.s32 %v151, 32
      %v156 = vadd.s32 %v151, 40
      %v157 = vadd.s32 %v151, 48
      %v158 = vadd.s32 %v151, 56
      %v159 = vsub.f32 %v149, -1.0
      %v160 = vrcp.pop 0.5
      %v161 = vmul.f32 0.5, %v160
      %v162 = vsub.f32 1.0, %v161
      %v163 = vmul.f32 %v160, %v162
      %v164 = vadd.f32 %v160, %v163
      %vm165 = vweird.f32 %v160
      %v166 = vsel %vm165, %v160, %v164
      %v167 = vmul.f32 %v159, %v166
      %v168 = vfloor.f32 %v167
      %v169 = vcvt.f32.s32.to.zero.pseudo %v168
      %v170 = vcvt.s32.f32 %v169
      %v171 = vmul.f32 %v170, 0.5
      %v172 = vadd.f32 %v171, -1.0
      %v173 = vadd.f32 %v172, 0.5
      %v174 = vsub.f32 %v149, %v172
      %v175 = vsub.f32 %v173, %v172
      %v176 = vrcp.pop %v175
      %v177 = vmul.f32 %v175, %v176
      %v178 = vsub.f32 1.0, %v177
      %v179 = vmul.f32 %v176, %v178
      %v180 = vadd.f32 %v176, %v179
      %vm181 = vweird.f32 %v175
      %vm182 = vweird.f32 %v176
      %vm183 = vmor %vm181, %vm182
      %v184 = vsel %vm183, %v176, %v180
      %v185 = vand.u32 2147483647, %v175
      %vm186 = vcmp.eq.f32.partialorder %v185, 8.507059e+37
      %v187 = vand.u32 %v175, 2147483648
      %v188 = vor.u32 1.1754944e-38, %v187
      %v189 = vsel %vm186, %v188, %v184
      %v190 = vmul.f32 %v174, %v189
      %v191 = vmul.u32 %v169, 73856093
      %v192 = vadd.s32 %v169, 1
      %v193 = vmul.u32 %v192, 73856093
      %v194 = vsub.f32 1.0, %v190
      %v195 = vmul.u32 %v169, 19349663
      %v196 = vmul.u32 %v192, 19349663
      %v197 = vmul.u32 %v169, 83492791
      %v198 = vmul.u32 %v192, 83492791
      %v199 = vrot.slane %v195, 5
      %v200 = vrot.slane %v199, 4
      %v201 = vxor.u32 %v191, %v200
      %v202 = vrot.slane %v197, 6
      %v203 = vrot.slane %v202, 4
      %v204 = vxor.u32 %v201, %v203
      %v205 = vand.u32 %v204, 63
      %v207 = vrot.slane %v194, 5
      %v208 = vrot.slane %v207, 4
      %v210 = vmul.f32 %v194, %v208
      %v211 = vrot.slane %v194, 6
      %v212 = vrot.slane %v211, 4
      %v214 = vmul.f32 %v210, %v212
      %v215 = vperm.slane %v205, 0
      %v216 = vperm.slane %v205, 4
      %v217 = vperm.slane %v215, 0
      %v218 = vperm.slane %v216, 0
      %vm219 = vcmp.eq.s32.totalorder %v151, %v217
      %vm220 = vcmp.eq.s32.totalorder %v151, %v218
      %vm221 = vcmp.eq.s32.totalorder %v152, %v217
      %vm222 = vcmp.eq.s32.totalorder %v152, %v218
      %vm223 = vcmp.eq.s32.totalorder %v153, %v217
      %vm224 = vcmp.eq.s32.totalorder %v153, %v218
      %vm225 = vcmp.eq.s32.totalorder %v154, %v217
      %vm226 = vcmp.eq.s32.totalorder %v154, %v218
      %vm227 = vcmp.eq.s32.totalorder %v155, %v217
      %vm228 = vcmp.eq.s32.totalorder %v155, %v218
      %vm229 = vcmp.eq.s32.totalorder %v156, %v217
      %vm230 = vcmp.eq.s32.totalorder %v156, %v218
      %vm231 = vcmp.eq.s32.totalorder %v157, %v217
      %vm232 = vcmp.eq.s32.totalorder %v157, %v218
      %vm233 = vcmp.eq.s32.totalorder %v158, %v217
      %vm234 = vcmp.eq.s32.totalorder %v158, %v218
      %v236 = vperm.slane %v214, 0
      %v237 = vperm.slane %v214, 4
      %v240 = vperm.slane %v236, 0
      %v241 = vperm.slane %v237, 0
      %v242 = vsel %vm219, %v240, 0.0
      %v243 = vsel %vm220, %v241, 0.0
      %v244 = vsel %vm221, %v240, 0.0
      %v245 = vsel %vm222, %v241, 0.0
      %v246 = vsel %vm223, %v240, 0.0
      %v247 = vsel %vm224, %v241, 0.0
      %v248 = vsel %vm225, %v240, 0.0
      %v249 = vsel %vm226, %v241, 0.0
      %v250 = vsel %vm227, %v240, 0.0
      %v251 = vsel %vm228, %v241, 0.0
      %v252 = vsel %vm229, %v240, 0.0
      %v253 = vsel %vm230, %v241, 0.0
      %v254 = vsel %vm231, %v240, 0.0
      %v255 = vsel %vm232, %v241, 0.0
      %v256 = vsel %vm233, %v240, 0.0
      %v257 = vsel %vm234, %v241, 0.0
      %v258 = vrot.slane %v198, 6
      %v259 = vrot.slane %v258, 4
      %v260 = vxor.u32 %v201, %v259
      %v261 = vand.u32 %v260, 63
      %v263 = vrot.slane %v190, 6
      %v264 = vrot.slane %v263, 4
      %v266 = vmul.f32 %v210, %v264
      %v267 = vperm.slane %v261, 0
      %v268 = vperm.slane %v261, 4
      %v269 = vperm.slane %v267, 0
      %v270 = vperm.slane %v268, 0
      %vm271 = vcmp.eq.s32.totalorder %v151, %v269
      %vm272 = vcmp.eq.s32.totalorder %v151, %v270
      %vm273 = vcmp.eq.s32.totalorder %v152, %v269
      %vm274 = vcmp.eq.s32.totalorder %v152, %v270
      %vm275 = vcmp.eq.s32.totalorder %v153, %v269
      %vm276 = vcmp.eq.s32.totalorder %v153, %v270
      %vm277 = vcmp.eq.s32.totalorder %v154, %v269
      %vm278 = vcmp.eq.s32.totalorder %v154, %v270
      %vm279 = vcmp.eq.s32.totalorder %v155, %v269
      %vm280 = vcmp.eq.s32.totalorder %v155, %v270
      %vm281 = vcmp.eq.s32.totalorder %v156, %v269
      %vm282 = vcmp.eq.s32.totalorder %v156, %v270
      %vm283 = vcmp.eq.s32.totalorder %v157, %v269
      %vm284 = vcmp.eq.s32.totalorder %v157, %v270
      %vm285 = vcmp.eq.s32.totalorder %v158, %v269
      %vm286 = vcmp.eq.s32.totalorder %v158, %v270
      %v288 = vperm.slane %v266, 0
      %v289 = vperm.slane %v266, 4
      %v292 = vperm.slane %v288, 0
      %v293 = vperm.slane %v289, 0
      %v294 = vsel %vm271, %v292, 0.0
      %v295 = vsel %vm272, %v293, 0.0
      %v296 = vsel %vm273, %v292, 0.0
      %v297 = vsel %vm274, %v293, 0.0
      %v298 = vsel %vm275, %v292, 0.0
      %v299 = vsel %vm276, %v293, 0.0
      %v300 = vsel %vm277, %v292, 0.0
      %v301 = vsel %vm278, %v293, 0.0
      %v302 = vsel %vm279, %v292, 0.0
      %v303 = vsel %vm280, %v293, 0.0
      %v304 = vsel %vm281, %v292, 0.0
      %v305 = vsel %vm282, %v293, 0.0
      %v306 = vsel %vm283, %v292, 0.0
      %v307 = vsel %vm284, %v293, 0.0
      %v308 = vsel %vm285, %v292, 0.0
      %v309 = vsel %vm286, %v293, 0.0
      %v310 = vadd.f32 %v242, %v294
      %v311 = vadd.f32 %v243, %v295
      %v312 = vadd.f32 %v244, %v296
      %v313 = vadd.f32 %v245, %v297
      %v314 = vadd.f32 %v246, %v298
      %v315 = vadd.f32 %v247, %v299
      %v316 = vadd.f32 %v248, %v300
      %v317 = vadd.f32 %v249, %v301
      %v318 = vadd.f32 %v250, %v302
      %v319 = vadd.f32 %v251, %v303
      %v320 = vadd.f32 %v252, %v304
      %v321 = vadd.f32 %v253, %v305
      %v322 = vadd.f32 %v254, %v306
      %v323 = vadd.f32 %v255, %v307
      %v324 = vadd.f32 %v256, %v308
      %v325 = vadd.f32 %v257, %v309
      %v326 = vrot.slane %v196, 5
      %v327 = vrot.slane %v326, 4
      %v328 = vxor.u32 %v191, %v327
      %v329 = vxor.u32 %v328, %v203
      %v330 = vand.u32 %v329, 63
      %v331 = vrot.slane %v190, 5
      %v332 = vrot.slane %v331, 4
      %v334 = vmul.f32 %v194, %v332
      %v335 = vmul.f32 %v334, %v212
      %v336 = vperm.slane %v330, 0
      %v337 = vperm.slane %v330, 4
      %v338 = vperm.slane %v336, 0
      %v339 = vperm.slane %v337, 0
      %vm340 = vcmp.eq.s32.totalorder %v151, %v338
      %vm341 = vcmp.eq.s32.totalorder %v151, %v339
      %vm342 = vcmp.eq.s32.totalorder %v152, %v338
      %vm343 = vcmp.eq.s32.totalorder %v152, %v339
      %vm344 = vcmp.eq.s32.totalorder %v153, %v338
      %vm345 = vcmp.eq.s32.totalorder %v153, %v339
      %vm346 = vcmp.eq.s32.totalorder %v154, %v338
      %vm347 = vcmp.eq.s32.totalorder %v154, %v339
      %vm348 = vcmp.eq.s32.totalorder %v155, %v338
      %vm349 = vcmp.eq.s32.totalorder %v155, %v339
      %vm350 = vcmp.eq.s32.totalorder %v156, %v338
      %vm351 = vcmp.eq.s32.totalorder %v156, %v339
      %vm352 = vcmp.eq.s32.totalorder %v157, %v338
      %vm353 = vcmp.eq.s32.totalorder %v157, %v339
      %vm354 = vcmp.eq.s32.totalorder %v158, %v338
      %vm355 = vcmp.eq.s32.totalorder %v158, %v339
      %v357 = vperm.slane %v335, 0
      %v358 = vperm.slane %v335, 4
      %v361 = vperm.slane %v357, 0
      %v362 = vperm.slane %v358, 0
      %v363 = vsel %vm340, %v361, 0.0
      %v364 = vsel %vm341, %v362, 0.0
      %v365 = vsel %vm342, %v361, 0.0
      %v366 = vsel %vm343, %v362, 0.0
      %v367 = vsel %vm344, %v361, 0.0
      %v368 = vsel %vm345, %v362, 0.0
      %v369 = vsel %vm346, %v361, 0.0
      %v370 = vsel %vm347, %v362, 0.0
      %v371 = vsel %vm348, %v361, 0.0
      %v372 = vsel %vm349, %v362, 0.0
      %v373 = vsel %vm350, %v361, 0.0
      %v374 = vsel %vm351, %v362, 0.0
      %v375 = vsel %vm352, %v361, 0.0
      %v376 = vsel %vm353, %v362, 0.0
      %v377 = vsel %vm354, %v361, 0.0
      %v378 = vsel %vm355, %v362, 0.0
      %v379 = vadd.f32 %v310, %v363
      %v380 = vadd.f32 %v311, %v364
      %v381 = vadd.f32 %v312, %v365
      %v382 = vadd.f32 %v313, %v366
      %v383 = vadd.f32 %v314, %v367
      %v384 = vadd.f32 %v315, %v368
      %v385 = vadd.f32 %v316, %v369
      %v386 = vadd.f32 %v317, %v370
      %v387 = vadd.f32 %v318, %v371
      %v388 = vadd.f32 %v319, %v372
      %v389 = vadd.f32 %v320, %v373
      %v390 = vadd.f32 %v321, %v374
      %v391 = vadd.f32 %v322, %v375
      %v392 = vadd.f32 %v323, %v376
      %v393 = vadd.f32 %v324, %v377
      %v394 = vadd.f32 %v325, %v378
      %v395 = vxor.u32 %v328, %v259
      %v396 = vand.u32 %v395, 63
      %v397 = vmul.f32 %v334, %v264
      %v398 = vperm.slane %v396, 0
      %v399 = vperm.slane %v396, 4
      %v400 = vperm.slane %v398, 0
      %v401 = vperm.slane %v399, 0
      %vm402 = vcmp.eq.s32.totalorder %v151, %v400
      %vm403 = vcmp.eq.s32.totalorder %v151, %v401
      %vm404 = vcmp.eq.s32.totalorder %v152, %v400
      %vm405 = vcmp.eq.s32.totalorder %v152, %v401
      %vm406 = vcmp.eq.s32.totalorder %v153, %v400
      %vm407 = vcmp.eq.s32.totalorder %v153, %v401
      %vm408 = vcmp.eq.s32.totalorder %v154, %v400
      %vm409 = vcmp.eq.s32.totalorder %v154, %v401
      %vm410 = vcmp.eq.s32.totalorder %v155, %v400
      %vm411 = vcmp.eq.s32.totalorder %v155, %v401
      %vm412 = vcmp.eq.s32.totalorder %v156, %v400
      %vm413 = vcmp.eq.s32.totalorder %v156, %v401
      %vm414 = vcmp.eq.s32.totalorder %v157, %v400
      %vm415 = vcmp.eq.s32.totalorder %v157, %v401
      %vm416 = vcmp.eq.s32.totalorder %v158, %v400
      %vm417 = vcmp.eq.s32.totalorder %v158, %v401
      %v419 = vperm.slane %v397, 0
      %v420 = vperm.slane %v397, 4
      %v423 = vperm.slane %v419, 0
      %v424 = vperm.slane %v420, 0
      %v425 = vsel %vm402, %v423, 0.0
      %v426 = vsel %vm403, %v424, 0.0
      %v427 = vsel %vm404, %v423, 0.0
      %v428 = vsel %vm405, %v424, 0.0
      %v429 = vsel %vm406, %v423, 0.0
      %v430 = vsel %vm407, %v424, 0.0
      %v431 = vsel %vm408, %v423, 0.0
      %v432 = vsel %vm409, %v424, 0.0
      %v433 = vsel %vm410, %v423, 0.0
      %v434 = vsel %vm411, %v424, 0.0
      %v435 = vsel %vm412, %v423, 0.0
      %v436 = vsel %vm413, %v424, 0.0
      %v437 = vsel %vm414, %v423, 0.0
      %v438 = vsel %vm415, %v424, 0.0
      %v439 = vsel %vm416, %v423, 0.0
      %v440 = vsel %vm417, %v424, 0.0
      %v441 = vadd.f32 %v379, %v425
      %v442 = vadd.f32 %v380, %v426
      %v443 = vadd.f32 %v381, %v427
      %v444 = vadd.f32 %v382, %v428
      %v445 = vadd.f32 %v383, %v429
      %v446 = vadd.f32 %v384, %v430
      %v447 = vadd.f32 %v385, %v431
      %v448 = vadd.f32 %v386, %v432
      %v449 = vadd.f32 %v387, %v433
      %v450 = vadd.f32 %v388, %v434
      %v451 = vadd.f32 %v389, %v435
      %v452 = vadd.f32 %v390, %v436
      %v453 = vadd.f32 %v391, %v437
      %v454 = vadd.f32 %v392, %v438
      %v455 = vadd.f32 %v393, %v439
      %v456 = vadd.f32 %v394, %v440
      %v457 = vxor.u32 %v193, %v200
      %v458 = vxor.u32 %v457, %v203
      %v459 = vand.u32 %v458, 63
      %v460 = vmul.f32 %v190, %v208
      %v461 = vmul.f32 %v460, %v212
      %v462 = vperm.slane %v459, 0
      %v463 = vperm.slane %v459, 4
      %v464 = vperm.slane %v462, 0
      %v465 = vperm.slane %v463, 0
      %vm466 = vcmp.eq.s32.totalorder %v151, %v464
      %vm467 = vcmp.eq.s32.totalorder %v151, %v465
      %vm468 = vcmp.eq.s32.totalorder %v152, %v464
      %vm469 = vcmp.eq.s32.totalorder %v152, %v465
      %vm470 = vcmp.eq.s32.totalorder %v153, %v464
      %vm471 = vcmp.eq.s32.totalorder %v153, %v465
      %vm472 = vcmp.eq.s32.totalorder %v154, %v464
      %vm473 = vcmp.eq.s32.totalorder %v154, %v465
      %vm474 = vcmp.eq.s32.totalorder %v155, %v464
      %vm475 = vcmp.eq.s32.totalorder %v155, %v465
      %vm476 = vcmp.eq.s32.totalorder %v156, %v464
      %vm477 = vcmp.eq.s32.totalorder %v156, %v465
      %vm478 = vcmp.eq.s32.totalorder %v157, %v464
      %vm479 = vcmp.eq.s32.totalorder %v157, %v465
      %vm480 = vcmp.eq.s32.totalorder %v158, %v464
      %vm481 = vcmp.eq.s32.totalorder %v158, %v465
      %v483 = vperm.slane %v461, 0
      %v484 = vperm.slane %v461, 4
      %v487 = vperm.slane %v483, 0
      %v488 = vperm.slane %v484, 0
      %v489 = vsel %vm466, %v487, 0.0
      %v490 = vsel %vm467, %v488, 0.0
      %v491 = vsel %vm468, %v487, 0.0
      %v492 = vsel %vm469, %v488, 0.0
      %v493 = vsel %vm470, %v487, 0.0
      %v494 = vsel %vm471, %v488, 0.0
      %v495 = vsel %vm472, %v487, 0.0
      %v496 = vsel %vm473, %v488, 0.0
      %v497 = vsel %vm474, %v487, 0.0
      %v498 = vsel %vm475, %v488, 0.0
      %v499 = vsel %vm476, %v487, 0.0
      %v500 = vsel %vm477, %v488, 0.0
      %v501 = vsel %vm478, %v487, 0.0
      %v502 = vsel %vm479, %v488, 0.0
      %v503 = vsel %vm480, %v487, 0.0
      %v504 = vsel %vm481, %v488, 0.0
      %v505 = vadd.f32 %v441, %v489
      %v506 = vadd.f32 %v442, %v490
      %v507 = vadd.f32 %v443, %v491
      %v508 = vadd.f32 %v444, %v492
      %v509 = vadd.f32 %v445, %v493
      %v510 = vadd.f32 %v446, %v494
      %v511 = vadd.f32 %v447, %v495
      %v512 = vadd.f32 %v448, %v496
      %v513 = vadd.f32 %v449, %v497
      %v514 = vadd.f32 %v450, %v498
      %v515 = vadd.f32 %v451, %v499
      %v516 = vadd.f32 %v452, %v500
      %v517 = vadd.f32 %v453, %v501
      %v518 = vadd.f32 %v454, %v502
      %v519 = vadd.f32 %v455, %v503
      %v520 = vadd.f32 %v456, %v504
      %v521 = vxor.u32 %v457, %v259
      %v522 = vand.u32 %v521, 63
      %v523 = vmul.f32 %v460, %v264
      %v524 = vperm.slane %v522, 0
      %v525 = vperm.slane %v522, 4
      %v526 = vperm.slane %v524, 0
      %v527 = vperm.slane %v525, 0
      %vm528 = vcmp.eq.s32.totalorder %v151, %v526
      %vm529 = vcmp.eq.s32.totalorder %v151, %v527
      %vm530 = vcmp.eq.s32.totalorder %v152, %v526
      %vm531 = vcmp.eq.s32.totalorder %v152, %v527
      %vm532 = vcmp.eq.s32.totalorder %v153, %v526
      %vm533 = vcmp.eq.s32.totalorder %v153, %v527
      %vm534 = vcmp.eq.s32.totalorder %v154, %v526
      %vm535 = vcmp.eq.s32.totalorder %v154, %v527
      %vm536 = vcmp.eq.s32.totalorder %v155, %v526
      %vm537 = vcmp.eq.s32.totalorder %v155, %v527
      %vm538 = vcmp.eq.s32.totalorder %v156, %v526
      %vm539 = vcmp.eq.s32.totalorder %v156, %v527
      %vm540 = vcmp.eq.s32.totalorder %v157, %v526
      %vm541 = vcmp.eq.s32.totalorder %v157, %v527
      %vm542 = vcmp.eq.s32.totalorder %v158, %v526
      %vm543 = vcmp.eq.s32.totalorder %v158, %v527
      %v545 = vperm.slane %v523, 0
      %v546 = vperm.slane %v523, 4
      %v549 = vperm.slane %v545, 0
      %v550 = vperm.slane %v546, 0
      %v551 = vsel %vm528, %v549, 0.0
      %v552 = vsel %vm529, %v550, 0.0
      %v553 = vsel %vm530, %v549, 0.0
      %v554 = vsel %vm531, %v550, 0.0
      %v555 = vsel %vm532, %v549, 0.0
      %v556 = vsel %vm533, %v550, 0.0
      %v557 = vsel %vm534, %v549, 0.0
      %v558 = vsel %vm535, %v550, 0.0
      %v559 = vsel %vm536, %v549, 0.0
      %v560 = vsel %vm537, %v550, 0.0
      %v561 = vsel %vm538, %v549, 0.0
      %v562 = vsel %vm539, %v550, 0.0
      %v563 = vsel %vm540, %v549, 0.0
      %v564 = vsel %vm541, %v550, 0.0
      %v565 = vsel %vm542, %v549, 0.0
      %v566 = vsel %vm543, %v550, 0.0
      %v567 = vadd.f32 %v505, %v551
      %v568 = vadd.f32 %v506, %v552
      %v569 = vadd.f32 %v507, %v553
      %v570 = vadd.f32 %v508, %v554
      %v571 = vadd.f32 %v509, %v555
      %v572 = vadd.f32 %v510, %v556
      %v573 = vadd.f32 %v511, %v557
      %v574 = vadd.f32 %v512, %v558
      %v575 = vadd.f32 %v513, %v559
      %v576 = vadd.f32 %v514, %v560
      %v577 = vadd.f32 %v515, %v561
      %v578 = vadd.f32 %v516, %v562
      %v579 = vadd.f32 %v517, %v563
      %v580 = vadd.f32 %v518, %v564
      %v581 = vadd.f32 %v519, %v565
      %v582 = vadd.f32 %v520, %v566
      %v583 = vxor.u32 %v193, %v327
      %v584 = vxor.u32 %v583, %v203
      %v585 = vand.u32 %v584, 63
      %v586 = vmul.f32 %v190, %v332
      %v587 = vmul.f32 %v586, %v212
      %v588 = vperm.slane %v585, 0
      %v589 = vperm.slane %v585, 4
      %v590 = vperm.slane %v588, 0
      %v591 = vperm.slane %v589, 0
      %vm592 = vcmp.eq.s32.totalorder %v151, %v590
      %vm593 = vcmp.eq.s32.totalorder %v151, %v591
      %vm594 = vcmp.eq.s32.totalorder %v152, %v590
      %vm595 = vcmp.eq.s32.totalorder %v152, %v591
      %vm596 = vcmp.eq.s32.totalorder %v153, %v590
      %vm597 = vcmp.eq.s32.totalorder %v153, %v591
      %vm598 = vcmp.eq.s32.totalorder %v154, %v590
      %vm599 = vcmp.eq.s32.totalorder %v154, %v591
      %vm600 = vcmp.eq.s32.totalorder %v155, %v590
      %vm601 = vcmp.eq.s32.totalorder %v155, %v591
      %vm602 = vcmp.eq.s32.totalorder %v156, %v590
      %vm603 = vcmp.eq.s32.totalorder %v156, %v591
      %vm604 = vcmp.eq.s32.totalorder %v157, %v590
      %vm605 = vcmp.eq.s32.totalorder %v157, %v591
      %vm606 = vcmp.eq.s32.totalorder %v158, %v590
      %vm607 = vcmp.eq.s32.totalorder %v158, %v591
      %v609 = vperm.slane %v587, 0
      %v610 = vperm.slane %v587, 4
      %v613 = vperm.slane %v609, 0
      %v614 = vperm.slane %v610, 0
      %v615 = vsel %vm592, %v613, 0.0
      %v616 = vsel %vm593, %v614, 0.0
      %v617 = vsel %vm594, %v613, 0.0
      %v618 = vsel %vm595, %v614, 0.0
      %v619 = vsel %vm596, %v613, 0.0
      %v620 = vsel %vm597, %v614, 0.0
      %v621 = vsel %vm598, %v613, 0.0
      %v622 = vsel %vm599, %v614, 0.0
      %v623 = vsel %vm600, %v613, 0.0
      %v624 = vsel %vm601, %v614, 0.0
      %v625 = vsel %vm602, %v613, 0.0
      %v626 = vsel %vm603, %v614, 0.0
      %v627 = vsel %vm604, %v613, 0.0
      %v628 = vsel %vm605, %v614, 0.0
      %v629 = vsel %vm606, %v613, 0.0
      %v630 = vsel %vm607, %v614, 0.0
      %v631 = vadd.f32 %v567, %v615
      %v632 = vadd.f32 %v568, %v616
      %v633 = vadd.f32 %v569, %v617
      %v634 = vadd.f32 %v570, %v618
      %v635 = vadd.f32 %v571, %v619
      %v636 = vadd.f32 %v572, %v620
      %v637 = vadd.f32 %v573, %v621
      %v638 = vadd.f32 %v574, %v622
      %v639 = vadd.f32 %v575, %v623
      %v640 = vadd.f32 %v576, %v624
      %v641 = vadd.f32 %v577, %v625
      %v642 = vadd.f32 %v578, %v626
      %v643 = vadd.f32 %v579, %v627
      %v644 = vadd.f32 %v580, %v628
      %v645 = vadd.f32 %v581, %v629
      %v646 = vadd.f32 %v582, %v630
      %v647 = vxor.u32 %v583, %v259
      %v648 = vand.u32 %v647, 63
      %v649 = vmul.f32 %v586, %v264
      %v650 = vperm.slane %v648, 0
      %v651 = vperm.slane %v648, 4
      %v652 = vperm.slane %v650, 0
      %v653 = vperm.slane %v651, 0
      %vm654 = vcmp.eq.s32.totalorder %v151, %v652
      %vm655 = vcmp.eq.s32.totalorder %v151, %v653
      %vm656 = vcmp.eq.s32.totalorder %v152, %v652
      %vm657 = vcmp.eq.s32.totalorder %v152, %v653
      %vm658 = vcmp.eq.s32.totalorder %v153, %v652
      %vm659 = vcmp.eq.s32.totalorder %v153, %v653
      %vm660 = vcmp.eq.s32.totalorder %v154, %v652
      %vm661 = vcmp.eq.s32.totalorder %v154, %v653
      %vm662 = vcmp.eq.s32.totalorder %v155, %v652
      %vm663 = vcmp.eq.s32.totalorder %v155, %v653
      %vm664 = vcmp.eq.s32.totalorder %v156, %v652
      %vm665 = vcmp.eq.s32.totalorder %v156, %v653
      %vm666 = vcmp.eq.s32.totalorder %v157, %v652
      %vm667 = vcmp.eq.s32.totalorder %v157, %v653
      %vm668 = vcmp.eq.s32.totalorder %v158, %v652
      %vm669 = vcmp.eq.s32.totalorder %v158, %v653
      %v671 = vperm.slane %v649, 0
      %v672 = vperm.slane %v649, 4
      %v675 = vperm.slane %v671, 0
      %v676 = vperm.slane %v672, 0
      %v677 = vsel %vm654, %v675, 0.0
      %v678 = vsel %vm655, %v676, 0.0
      %v679 = vsel %vm656, %v675, 0.0
      %v680 = vsel %vm657, %v676, 0.0
      %v681 = vsel %vm658, %v675, 0.0
      %v682 = vsel %vm659, %v676, 0.0
      %v683 = vsel %vm660, %v675, 0.0
      %v684 = vsel %vm661, %v676, 0.0
      %v685 = vsel %vm662, %v675, 0.0
      %v686 = vsel %vm663, %v676, 0.0
      %v687 = vsel %vm664, %v675, 0.0
      %v688 = vsel %vm665, %v676, 0.0
      %v689 = vsel %vm666, %v675, 0.0
      %v690 = vsel %vm667, %v676, 0.0
      %v691 = vsel %vm668, %v675, 0.0
      %v692 = vsel %vm669, %v676, 0.0
      %v693 = vadd.f32 %v631, %v677
      %v694 = vadd.f32 %v632, %v678
      %v695 = vadd.f32 %v633, %v679
      %v696 = vadd.f32 %v634, %v680
      %v697 = vadd.f32 %v635, %v681
      %v698 = vadd.f32 %v636, %v682
      %v699 = vadd.f32 %v637, %v683
      %v700 = vadd.f32 %v638, %v684
      %v701 = vadd.f32 %v639, %v685
      %v702 = vadd.f32 %v640, %v686
      %v703 = vadd.f32 %v641, %v687
      %v704 = vadd.f32 %v642, %v688
      %v705 = vadd.f32 %v643, %v689
      %v706 = vadd.f32 %v644, %v690
      %v707 = vadd.f32 %v645, %v691
      %v708 = vadd.f32 %v646, %v692
      %v709 = vrcp.pop 0.25
      %v710 = vmul.f32 0.25, %v709
      %v711 = vsub.f32 1.0, %v710
      %v712 = vmul.f32 %v709, %v711
      %v713 = vadd.f32 %v709, %v712
      %vm714 = vweird.f32 %v709
      %v715 = vsel %vm714, %v709, %v713
      %v716 = vmul.f32 %v159, %v715
      %v717 = vfloor.f32 %v716
      %v718 = vcvt.f32.s32.to.zero.pseudo %v717
      %v719 = vcvt.s32.f32 %v718
      %v720 = vmul.f32 %v719, 0.25
      %v721 = vadd.f32 %v720, -1.0
      %v722 = vadd.f32 %v721, 0.25
      %v723 = vsub.f32 %v149, %v721
      %v724 = vsub.f32 %v722, %v721
      %v725 = vrcp.pop %v724
      %v726 = vmul.f32 %v724, %v725
      %v727 = vsub.f32 1.0, %v726
      %v728 = vmul.f32 %v725, %v727
      %v729 = vadd.f32 %v725, %v728
      %vm730 = vweird.f32 %v724
      %vm731 = vweird.f32 %v725
      %vm732 = vmor %vm730, %vm731
      %v733 = vsel %vm732, %v725, %v729
      %v734 = vand.u32 2147483647, %v724
      %vm735 = vcmp.eq.f32.partialorder %v734, 8.507059e+37
      %v736 = vand.u32 %v724, 2147483648
      %v737 = vor.u32 1.1754944e-38, %v736
      %v738 = vsel %vm735, %v737, %v733
      %v739 = vmul.f32 %v723, %v738
      %v740 = vmul.u32 %v718, 73856093
      %v741 = vadd.s32 %v718, 1
      %v742 = vmul.u32 %v741, 73856093
      %v743 = vsub.f32 1.0, %v739
      %v744 = vmul.u32 %v718, 19349663
      %v745 = vmul.u32 %v741, 19349663
      %v746 = vmul.u32 %v718, 83492791
      %v747 = vmul.u32 %v741, 83492791
      %v748 = vrot.slane %v744, 5
      %v749 = vrot.slane %v748, 4
      %v750 = vxor.u32 %v740, %v749
      %v751 = vrot.slane %v746, 6
      %v752 = vrot.slane %v751, 4
      %v753 = vxor.u32 %v750, %v752
      %v754 = vand.u32 %v753, 63
      %v756 = vrot.slane %v743, 5
      %v757 = vrot.slane %v756, 4
      %v759 = vmul.f32 %v743, %v757
      %v760 = vrot.slane %v743, 6
      %v761 = vrot.slane %v760, 4
      %v763 = vmul.f32 %v759, %v761
      %v764 = vperm.slane %v754, 0
      %v765 = vperm.slane %v754, 4
      %v766 = vperm.slane %v764, 0
      %v767 = vperm.slane %v765, 0
      %vm768 = vcmp.eq.s32.totalorder %v151, %v766
      %vm769 = vcmp.eq.s32.totalorder %v151, %v767
      %vm770 = vcmp.eq.s32.totalorder %v152, %v766
      %vm771 = vcmp.eq.s32.totalorder %v152, %v767
      %vm772 = vcmp.eq.s32.totalorder %v153, %v766
      %vm773 = vcmp.eq.s32.totalorder %v153, %v767
      %vm774 = vcmp.eq.s32.totalorder %v154, %v766
      %vm775 = vcmp.eq.s32.totalorder %v154, %v767
      %vm776 = vcmp.eq.s32.totalorder %v155, %v766
      %vm777 = vcmp.eq.s32.totalorder %v155, %v767
      %vm778 = vcmp.eq.s32.totalorder %v156, %v766
      %vm779 = vcmp.eq.s32.totalorder %v156, %v767
      %vm780 = vcmp.eq.s32.totalorder %v157, %v766
      %vm781 = vcmp.eq.s32.totalorder %v157, %v767
      %vm782 = vcmp.eq.s32.totalorder %v158, %v766
      %vm783 = vcmp.eq.s32.totalorder %v158, %v767
      %v785 = vperm.slane %v763, 0
      %v786 = vperm.slane %v763, 4
      %v789 = vperm.slane %v785, 0
      %v790 = vperm.slane %v786, 0
      %v791 = vsel %vm768, %v789, 0.0
      %v792 = vsel %vm769, %v790, 0.0
      %v793 = vsel %vm770, %v789, 0.0
      %v794 = vsel %vm771, %v790, 0.0
      %v795 = vsel %vm772, %v789, 0.0
      %v796 = vsel %vm773, %v790, 0.0
      %v797 = vsel %vm774, %v789, 0.0
      %v798 = vsel %vm775, %v790, 0.0
      %v799 = vsel %vm776, %v789, 0.0
      %v800 = vsel %vm777, %v790, 0.0
      %v801 = vsel %vm778, %v789, 0.0
      %v802 = vsel %vm779, %v790, 0.0
      %v803 = vsel %vm780, %v789, 0.0
      %v804 = vsel %vm781, %v790, 0.0
      %v805 = vsel %vm782, %v789, 0.0
      %v806 = vsel %vm783, %v790, 0.0
      %v807 = vrot.slane %v747, 6
      %v808 = vrot.slane %v807, 4
      %v809 = vxor.u32 %v750, %v808
      %v810 = vand.u32 %v809, 63
      %v812 = vrot.slane %v739, 6
      %v813 = vrot.slane %v812, 4
      %v815 = vmul.f32 %v759, %v813
      %v816 = vperm.slane %v810, 0
      %v817 = vperm.slane %v810, 4
      %v818 = vperm.slane %v816, 0
      %v819 = vperm.slane %v817, 0
      %vm820 = vcmp.eq.s32.totalorder %v151, %v818
      %vm821 = vcmp.eq.s32.totalorder %v151, %v819
      %vm822 = vcmp.eq.s32.totalorder %v152, %v818
      %vm823 = vcmp.eq.s32.totalorder %v152, %v819
      %vm824 = vcmp.eq.s32.totalorder %v153, %v818
      %vm825 = vcmp.eq.s32.totalorder %v153, %v819
      %vm826 = vcmp.eq.s32.totalorder %v154, %v818
      %vm827 = vcmp.eq.s32.totalorder %v154, %v819
      %vm828 = vcmp.eq.s32.totalorder %v155, %v818
      %vm829 = vcmp.eq.s32.totalorder %v155, %v819
      %vm830 = vcmp.eq.s32.totalorder %v156, %v818
      %vm831 = vcmp.eq.s32.totalorder %v156, %v819
      %vm832 = vcmp.eq.s32.totalorder %v157, %v818
      %vm833 = vcmp.eq.s32.totalorder %v157, %v819
      %vm834 = vcmp.eq.s32.totalorder %v158, %v818
      %vm835 = vcmp.eq.s32.totalorder %v158, %v819
      %v837 = vperm.slane %v815, 0
      %v838 = vperm.slane %v815, 4
      %v841 = vperm.slane %v837, 0
      %v842 = vperm.slane %v838, 0
      %v843 = vsel %vm820, %v841, 0.0
      %v844 = vsel %vm821, %v842, 0.0
      %v845 = vsel %vm822, %v841, 0.0
      %v846 = vsel %vm823, %v842, 0.0
      %v847 = vsel %vm824, %v841, 0.0
      %v848 = vsel %vm825, %v842, 0.0
      %v849 = vsel %vm826, %v841, 0.0
      %v850 = vsel %vm827, %v842, 0.0
      %v851 = vsel %vm828, %v841, 0.0
      %v852 = vsel %vm829, %v842, 0.0
      %v853 = vsel %vm830, %v841, 0.0
      %v854 = vsel %vm831, %v842, 0.0
      %v855 = vsel %vm832, %v841, 0.0
      %v856 = vsel %vm833, %v842, 0.0
      %v857 = vsel %vm834, %v841, 0.0
      %v858 = vsel %vm835, %v842, 0.0
      %v859 = vadd.f32 %v791, %v843
      %v860 = vadd.f32 %v792, %v844
      %v861 = vadd.f32 %v793, %v845
      %v862 = vadd.f32 %v794, %v846
      %v863 = vadd.f32 %v795, %v847
      %v864 = vadd.f32 %v796, %v848
      %v865 = vadd.f32 %v797, %v849
      %v866 = vadd.f32 %v798, %v850
      %v867 = vadd.f32 %v799, %v851
      %v868 = vadd.f32 %v800, %v852
      %v869 = vadd.f32 %v801, %v853
      %v870 = vadd.f32 %v802, %v854
      %v871 = vadd.f32 %v803, %v855
      %v872 = vadd.f32 %v804, %v856
      %v873 = vadd.f32 %v805, %v857
      %v874 = vadd.f32 %v806, %v858
      %v875 = vrot.slane %v745, 5
      %v876 = vrot.slane %v875, 4
      %v877 = vxor.u32 %v740, %v876
      %v878 = vxor.u32 %v877, %v752
      %v879 = vand.u32 %v878, 63
      %v880 = vrot.slane %v739, 5
      %v881 = vrot.slane %v880, 4
      %v883 = vmul.f32 %v743, %v881
      %v884 = vmul.f32 %v883, %v761
      %v885 = vperm.slane %v879, 0
      %v886 = vperm.slane %v879, 4
      %v887 = vperm.slane %v885, 0
      %v888 = vperm.slane %v886, 0
      %vm889 = vcmp.eq.s32.totalorder %v151, %v887
      %vm890 = vcmp.eq.s32.totalorder %v151, %v888
      %vm891 = vcmp.eq.s32.totalorder %v152, %v887
      %vm892 = vcmp.eq.s32.totalorder %v152, %v888
      %vm893 = vcmp.eq.s32.totalorder %v153, %v887
      %vm894 = vcmp.eq.s32.totalorder %v153, %v888
      %vm895 = vcmp.eq.s32.totalorder %v154, %v887
      %vm896 = vcmp.eq.s32.totalorder %v154, %v888
      %vm897 = vcmp.eq.s32.totalorder %v155, %v887
      %vm898 = vcmp.eq.s32.totalorder %v155, %v888
      %vm899 = vcmp.eq.s32.totalorder %v156, %v887
      %vm900 = vcmp.eq.s32.totalorder %v156, %v888
      %vm901 = vcmp.eq.s32.totalorder %v157, %v887
      %vm902 = vcmp.eq.s32.totalorder %v157, %v888
      %vm903 = vcmp.eq.s32.totalorder %v158, %v887
      %vm904 = vcmp.eq.s32.totalorder %v158, %v888
      %v906 = vperm.slane %v884, 0
      %v907 = vperm.slane %v884, 4
      %v910 = vperm.slane %v906, 0
      %v911 = vperm.slane %v907, 0
      %v912 = vsel %vm889, %v910, 0.0
      %v913 = vsel %vm890, %v911, 0.0
      %v914 = vsel %vm891, %v910, 0.0
      %v915 = vsel %vm892, %v911, 0.0
      %v916 = vsel %vm893, %v910, 0.0
      %v917 = vsel %vm894, %v911, 0.0
      %v918 = vsel %vm895, %v910, 0.0
      %v919 = vsel %vm896, %v911, 0.0
      %v920 = vsel %vm897, %v910, 0.0
      %v921 = vsel %vm898, %v911, 0.0
      %v922 = vsel %vm899, %v910, 0.0
      %v923 = vsel %vm900, %v911, 0.0
      %v924 = vsel %vm901, %v910, 0.0
      %v925 = vsel %vm902, %v911, 0.0
      %v926 = vsel %vm903, %v910, 0.0
      %v927 = vsel %vm904, %v911, 0.0
      %v928 = vadd.f32 %v859, %v912
      %v929 = vadd.f32 %v860, %v913
      %v930 = vadd.f32 %v861, %v914
      %v931 = vadd.f32 %v862, %v915
      %v932 = vadd.f32 %v863, %v916
      %v933 = vadd.f32 %v864, %v917
      %v934 = vadd.f32 %v865, %v918
      %v935 = vadd.f32 %v866, %v919
      %v936 = vadd.f32 %v867, %v920
      %v937 = vadd.f32 %v868, %v921
      %v938 = vadd.f32 %v869, %v922
      %v939 = vadd.f32 %v870, %v923
      %v940 = vadd.f32 %v871, %v924
      %v941 = vadd.f32 %v872, %v925
      %v942 = vadd.f32 %v873, %v926
      %v943 = vadd.f32 %v874, %v927
      %v944 = vxor.u32 %v877, %v808
      %v945 = vand.u32 %v944, 63
      %v946 = vmul.f32 %v883, %v813
      %v947 = vperm.slane %v945, 0
      %v948 = vperm.slane %v945, 4
      %v949 = vperm.slane %v947, 0
      %v950 = vperm.slane %v948, 0
      %vm951 = vcmp.eq.s32.totalorder %v151, %v949
      %vm952 = vcmp.eq.s32.totalorder %v151, %v950
      %vm953 = vcmp.eq.s32.totalorder %v152, %v949
      %vm954 = vcmp.eq.s32.totalorder %v152, %v950
      %vm955 = vcmp.eq.s32.totalorder %v153, %v949
      %vm956 = vcmp.eq.s32.totalorder %v153, %v950
      %vm957 = vcmp.eq.s32.totalorder %v154, %v949
      %vm958 = vcmp.eq.s32.totalorder %v154, %v950
      %vm959 = vcmp.eq.s32.totalorder %v155, %v949
      %vm960 = vcmp.eq.s32.totalorder %v155, %v950
      %vm961 = vcmp.eq.s32.totalorder %v156, %v949
      %vm962 = vcmp.eq.s32.totalorder %v156, %v950
      %vm963 = vcmp.eq.s32.totalorder %v157, %v949
      %vm964 = vcmp.eq.s32.totalorder %v157, %v950
      %vm965 = vcmp.eq.s32.totalorder %v158, %v949
      %vm966 = vcmp.eq.s32.totalorder %v158, %v950
      %v968 = vperm.slane %v946, 0
      %v969 = vperm.slane %v946, 4
      %v972 = vperm.slane %v968, 0
      %v973 = vperm.slane %v969, 0
      %v974 = vsel %vm951, %v972, 0.0
      %v975 = vsel %vm952, %v973, 0.0
      %v976 = vsel %vm953, %v972, 0.0
      %v977 = vsel %vm954, %v973, 0.0
      %v978 = vsel %vm955, %v972, 0.0
      %v979 = vsel %vm956, %v973, 0.0
      %v980 = vsel %vm957, %v972, 0.0
      %v981 = vsel %vm958, %v973, 0.0
      %v982 = vsel %vm959, %v972, 0.0
      %v983 = vsel %vm960, %v973, 0.0
      %v984 = vsel %vm961, %v972, 0.0
      %v985 = vsel %vm962, %v973, 0.0
      %v986 = vsel %vm963, %v972, 0.0
      %v987 = vsel %vm964, %v973, 0.0
      %v988 = vsel %vm965, %v972, 0.0
      %v989 = vsel %vm966, %v973, 0.0
      %v990 = vadd.f32 %v928, %v974
      %v991 = vadd.f32 %v929, %v975
      %v992 = vadd.f32 %v930, %v976
      %v993 = vadd.f32 %v931, %v977
      %v994 = vadd.f32 %v932, %v978
      %v995 = vadd.f32 %v933, %v979
      %v996 = vadd.f32 %v934, %v980
      %v997 = vadd.f32 %v935, %v981
      %v998 = vadd.f32 %v936, %v982
      %v999 = vadd.f32 %v937, %v983
      %v1000 = vadd.f32 %v938, %v984
      %v1001 = vadd.f32 %v939, %v985
      %v1002 = vadd.f32 %v940, %v986
      %v1003 = vadd.f32 %v941, %v987
      %v1004 = vadd.f32 %v942, %v988
      %v1005 = vadd.f32 %v943, %v989
      %v1006 = vxor.u32 %v742, %v749
      %v1007 = vxor.u32 %v1006, %v752
      %v1008 = vand.u32 %v1007, 63
      %v1009 = vmul.f32 %v739, %v757
      %v1010 = vmul.f32 %v1009, %v761
      %v1011 = vperm.slane %v1008, 0
      %v1012 = vperm.slane %v1008, 4
      %v1013 = vperm.slane %v1011, 0
      %v1014 = vperm.slane %v1012, 0
      %vm1015 = vcmp.eq.s32.totalorder %v151, %v1013
      %vm1016 = vcmp.eq.s32.totalorder %v151, %v1014
      %vm1017 = vcmp.eq.s32.totalorder %v152, %v1013
      %vm1018 = vcmp.eq.s32.totalorder %v152, %v1014
      %vm1019 = vcmp.eq.s32.totalorder %v153, %v1013
      %vm1020 = vcmp.eq.s32.totalorder %v153, %v1014
      %vm1021 = vcmp.eq.s32.totalorder %v154, %v1013
      %vm1022 = vcmp.eq.s32.totalorder %v154, %v1014
      %vm1023 = vcmp.eq.s32.totalorder %v155, %v1013
      %vm1024 = vcmp.eq.s32.totalorder %v155, %v1014
      %vm1025 = vcmp.eq.s32.totalorder %v156, %v1013
      %vm1026 = vcmp.eq.s32.totalorder %v156, %v1014
      %vm1027 = vcmp.eq.s32.totalorder %v157, %v1013
      %vm1028 = vcmp.eq.s32.totalorder %v157, %v1014
      %vm1029 = vcmp.eq.s32.totalorder %v158, %v1013
      %vm1030 = vcmp.eq.s32.totalorder %v158, %v1014
      %v1032 = vperm.slane %v1010, 0
      %v1033 = vperm.slane %v1010, 4
      %v1036 = vperm.slane %v1032, 0
      %v1037 = vperm.slane %v1033, 0
      %v1038 = vsel %vm1015, %v1036, 0.0
      %v1039 = vsel %vm1016, %v1037, 0.0
      %v1040 = vsel %vm1017, %v1036, 0.0
      %v1041 = vsel %vm1018, %v1037, 0.0
      %v1042 = vsel %vm1019, %v1036, 0.0
      %v1043 = vsel %vm1020, %v1037, 0.0
      %v1044 = vsel %vm1021, %v1036, 0.0
      %v1045 = vsel %vm1022, %v1037, 0.0
      %v1046 = vsel %vm1023, %v1036, 0.0
      %v1047 = vsel %vm1024, %v1037, 0.0
      %v1048 = vsel %vm1025, %v1036, 0.0
      %v1049 = vsel %vm1026, %v1037, 0.0
      %v1050 = vsel %vm1027, %v1036, 0.0
      %v1051 = vsel %vm1028, %v1037, 0.0
      %v1052 = vsel %vm1029, %v1036, 0.0
      %v1053 = vsel %vm1030, %v1037, 0.0
      %v1054 = vadd.f32 %v990, %v1038
      %v1055 = vadd.f32 %v991, %v1039
      %v1056 = vadd.f32 %v992, %v1040
      %v1057 = vadd.f32 %v993, %v1041
      %v1058 = vadd.f32 %v994, %v1042
      %v1059 = vadd.f32 %v995, %v1043
      %v1060 = vadd.f32 %v996, %v1044
      %v1061 = vadd.f32 %v997, %v1045
      %v1062 = vadd.f32 %v998, %v1046
      %v1063 = vadd.f32 %v999, %v1047
      %v1064 = vadd.f32 %v1000, %v1048
      %v1065 = vadd.f32 %v1001, %v1049
      %v1066 = vadd.f32 %v1002, %v1050
      %v1067 = vadd.f32 %v1003, %v1051
      %v1068 = vadd.f32 %v1004, %v1052
      %v1069 = vadd.f32 %v1005, %v1053
      %v1070 = vxor.u32 %v1006, %v808
      %v1071 = vand.u32 %v1070, 63
      %v1072 = vmul.f32 %v1009, %v813
      %v1073 = vperm.slane %v1071, 0
      %v1074 = vperm.slane %v1071, 4
      %v1075 = vperm.slane %v1073, 0
      %v1076 = vperm.slane %v1074, 0
      %vm1077 = vcmp.eq.s32.totalorder %v151, %v1075
      %vm1078 = vcmp.eq.s32.totalorder %v151, %v1076
      %vm1079 = vcmp.eq.s32.totalorder %v152, %v1075
      %vm1080 = vcmp.eq.s32.totalorder %v152, %v1076
      %vm1081 = vcmp.eq.s32.totalorder %v153, %v1075
      %vm1082 = vcmp.eq.s32.totalorder %v153, %v1076
      %vm1083 = vcmp.eq.s32.totalorder %v154, %v1075
      %vm1084 = vcmp.eq.s32.totalorder %v154, %v1076
      %vm1085 = vcmp.eq.s32.totalorder %v155, %v1075
      %vm1086 = vcmp.eq.s32.totalorder %v155, %v1076
      %vm1087 = vcmp.eq.s32.totalorder %v156, %v1075
      %vm1088 = vcmp.eq.s32.totalorder %v156, %v1076
      %vm1089 = vcmp.eq.s32.totalorder %v157, %v1075
      %vm1090 = vcmp.eq.s32.totalorder %v157, %v1076
      %vm1091 = vcmp.eq.s32.totalorder %v158, %v1075
      %vm1092 = vcmp.eq.s32.totalorder %v158, %v1076
      %v1094 = vperm.slane %v1072, 0
      %v1095 = vperm.slane %v1072, 4
      %v1098 = vperm.slane %v1094, 0
      %v1099 = vperm.slane %v1095, 0
      %v1100 = vsel %vm1077, %v1098, 0.0
      %v1101 = vsel %vm1078, %v1099, 0.0
      %v1102 = vsel %vm1079, %v1098, 0.0
      %v1103 = vsel %vm1080, %v1099, 0.0
      %v1104 = vsel %vm1081, %v1098, 0.0
      %v1105 = vsel %vm1082, %v1099, 0.0
      %v1106 = vsel %vm1083, %v1098, 0.0
      %v1107 = vsel %vm1084, %v1099, 0.0
      %v1108 = vsel %vm1085, %v1098, 0.0
      %v1109 = vsel %vm1086, %v1099, 0.0
      %v1110 = vsel %vm1087, %v1098, 0.0
      %v1111 = vsel %vm1088, %v1099, 0.0
      %v1112 = vsel %vm1089, %v1098, 0.0
      %v1113 = vsel %vm1090, %v1099, 0.0
      %v1114 = vsel %vm1091, %v1098, 0.0
      %v1115 = vsel %vm1092, %v1099, 0.0
      %v1116 = vadd.f32 %v1054, %v1100
      %v1117 = vadd.f32 %v1055, %v1101
      %v1118 = vadd.f32 %v1056, %v1102
      %v1119 = vadd.f32 %v1057, %v1103
      %v1120 = vadd.f32 %v1058, %v1104
      %v1121 = vadd.f32 %v1059, %v1105
      %v1122 = vadd.f32 %v1060, %v1106
      %v1123 = vadd.f32 %v1061, %v1107
      %v1124 = vadd.f32 %v1062, %v1108
      %v1125 = vadd.f32 %v1063, %v1109
      %v1126 = vadd.f32 %v1064, %v1110
      %v1127 = vadd.f32 %v1065, %v1111
      %v1128 = vadd.f32 %v1066, %v1112
      %v1129 = vadd.f32 %v1067, %v1113
      %v1130 = vadd.f32 %v1068, %v1114
      %v1131 = vadd.f32 %v1069, %v1115
      %v1132 = vxor.u32 %v742, %v876
      %v1133 = vxor.u32 %v1132, %v752
      %v1134 = vand.u32 %v1133, 63
      %v1135 = vmul.f32 %v739, %v881
      %v1136 = vmul.f32 %v1135, %v761
      %v1137 = vperm.slane %v1134, 0
      %v1138 = vperm.slane %v1134, 4
      %v1139 = vperm.slane %v1137, 0
      %v1140 = vperm.slane %v1138, 0
      %vm1141 = vcmp.eq.s32.totalorder %v151, %v1139
      %vm1142 = vcmp.eq.s32.totalorder %v151, %v1140
      %vm1143 = vcmp.eq.s32.totalorder %v152, %v1139
      %vm1144 = vcmp.eq.s32.totalorder %v152, %v1140
      %vm1145 = vcmp.eq.s32.totalorder %v153, %v1139
      %vm1146 = vcmp.eq.s32.totalorder %v153, %v1140
      %vm1147 = vcmp.eq.s32.totalorder %v154, %v1139
      %vm1148 = vcmp.eq.s32.totalorder %v154, %v1140
      %vm1149 = vcmp.eq.s32.totalorder %v155, %v1139
      %vm1150 = vcmp.eq.s32.totalorder %v155, %v1140
      %vm1151 = vcmp.eq.s32.totalorder %v156, %v1139
      %vm1152 = vcmp.eq.s32.totalorder %v156, %v1140
      %vm1153 = vcmp.eq.s32.totalorder %v157, %v1139
      %vm1154 = vcmp.eq.s32.totalorder %v157, %v1140
      %vm1155 = vcmp.eq.s32.totalorder %v158, %v1139
      %vm1156 = vcmp.eq.s32.totalorder %v158, %v1140
      %v1158 = vperm.slane %v1136, 0
      %v1159 = vperm.slane %v1136, 4
      %v1162 = vperm.slane %v1158, 0
      %v1163 = vperm.slane %v1159, 0
      %v1164 = vsel %vm1141, %v1162, 0.0
      %v1165 = vsel %vm1142, %v1163, 0.0
      %v1166 = vsel %vm1143, %v1162, 0.0
      %v1167 = vsel %vm1144, %v1163, 0.0
      %v1168 = vsel %vm1145, %v1162, 0.0
      %v1169 = vsel %vm1146, %v1163, 0.0
      %v1170 = vsel %vm1147, %v1162, 0.0
      %v1171 = vsel %vm1148, %v1163, 0.0
      %v1172 = vsel %vm1149, %v1162, 0.0
      %v1173 = vsel %vm1150, %v1163, 0.0
      %v1174 = vsel %vm1151, %v1162, 0.0
      %v1175 = vsel %vm1152, %v1163, 0.0
      %v1176 = vsel %vm1153, %v1162, 0.0
      %v1177 = vsel %vm1154, %v1163, 0.0
      %v1178 = vsel %vm1155, %v1162, 0.0
      %v1179 = vsel %vm1156, %v1163, 0.0
      %v1180 = vadd.f32 %v1116, %v1164
      %v1181 = vadd.f32 %v1117, %v1165
      %v1182 = vadd.f32 %v1118, %v1166
      %v1183 = vadd.f32 %v1119, %v1167
      %v1184 = vadd.f32 %v1120, %v1168
      %v1185 = vadd.f32 %v1121, %v1169
      %v1186 = vadd.f32 %v1122, %v1170
      %v1187 = vadd.f32 %v1123, %v1171
      %v1188 = vadd.f32 %v1124, %v1172
      %v1189 = vadd.f32 %v1125, %v1173
      %v1190 = vadd.f32 %v1126, %v1174
      %v1191 = vadd.f32 %v1127, %v1175
      %v1192 = vadd.f32 %v1128, %v1176
      %v1193 = vadd.f32 %v1129, %v1177
      %v1194 = vadd.f32 %v1130, %v1178
      %v1195 = vadd.f32 %v1131, %v1179
      %v1196 = vxor.u32 %v1132, %v808
      %v1197 = vand.u32 %v1196, 63
      %v1198 = vmul.f32 %v1135, %v813
      %v1199 = vperm.slane %v1197, 0
      %v1200 = vperm.slane %v1197, 4
      %v1201 = vperm.slane %v1199, 0
      %v1202 = vperm.slane %v1200, 0
      %vm1203 = vcmp.eq.s32.totalorder %v151, %v1201
      %vm1204 = vcmp.eq.s32.totalorder %v151, %v1202
      %vm1205 = vcmp.eq.s32.totalorder %v152, %v1201
      %vm1206 = vcmp.eq.s32.totalorder %v152, %v1202
      %vm1207 = vcmp.eq.s32.totalorder %v153, %v1201
      %vm1208 = vcmp.eq.s32.totalorder %v153, %v1202
      %vm1209 = vcmp.eq.s32.totalorder %v154, %v1201
      %vm1210 = vcmp.eq.s32.totalorder %v154, %v1202
      %vm1211 = vcmp.eq.s32.totalorder %v155, %v1201
      %vm1212 = vcmp.eq.s32.totalorder %v155, %v1202
      %vm1213 = vcmp.eq.s32.totalorder %v156, %v1201
      %vm1214 = vcmp.eq.s32.totalorder %v156, %v1202
      %vm1215 = vcmp.eq.s32.totalorder %v157, %v1201
      %vm1216 = vcmp.eq.s32.totalorder %v157, %v1202
      %vm1217 = vcmp.eq.s32.totalorder %v158, %v1201
      %vm1218 = vcmp.eq.s32.totalorder %v158, %v1202
      %v1220 = vperm.slane %v1198, 0
      %v1221 = vperm.slane %v1198, 4
      %v1224 = vperm.slane %v1220, 0
      %v1225 = vperm.slane %v1221, 0
      %v1226 = vsel %vm1203, %v1224, 0.0
      %v1227 = vsel %vm1204, %v1225, 0.0
      %v1228 = vsel %vm1205, %v1224, 0.0
      %v1229 = vsel %vm1206, %v1225, 0.0
      %v1230 = vsel %vm1207, %v1224, 0.0
      %v1231 = vsel %vm1208, %v1225, 0.0
      %v1232 = vsel %vm1209, %v1224, 0.0
      %v1233 = vsel %vm1210, %v1225, 0.0
      %v1234 = vsel %vm1211, %v1224, 0.0
      %v1235 = vsel %vm1212, %v1225, 0.0
      %v1236 = vsel %vm1213, %v1224, 0.0
      %v1237 = vsel %vm1214, %v1225, 0.0
      %v1238 = vsel %vm1215, %v1224, 0.0
      %v1239 = vsel %vm1216, %v1225, 0.0
      %v1240 = vsel %vm1217, %v1224, 0.0
      %v1241 = vsel %vm1218, %v1225, 0.0
      %v1242 = vadd.f32 %v1180, %v1226
      %v1243 = vadd.f32 %v1181, %v1227
      %v1244 = vadd.f32 %v1182, %v1228
      %v1245 = vadd.f32 %v1183, %v1229
      %v1246 = vadd.f32 %v1184, %v1230
      %v1247 = vadd.f32 %v1185, %v1231
      %v1248 = vadd.f32 %v1186, %v1232
      %v1249 = vadd.f32 %v1187, %v1233
      %v1250 = vadd.f32 %v1188, %v1234
      %v1251 = vadd.f32 %v1189, %v1235
      %v1252 = vadd.f32 %v1190, %v1236
      %v1253 = vadd.f32 %v1191, %v1237
      %v1254 = vadd.f32 %v1192, %v1238
      %v1255 = vadd.f32 %v1193, %v1239
      %v1256 = vadd.f32 %v1194, %v1240
      %v1257 = vadd.f32 %v1195, %v1241
      %v1258 = vld [vmem:[%s1] sm:$0xff]
      %v1259 = vld [vmem:[%s1 + $0x8] sm:$0xff]
      %v1260 = vld [vmem:[%s1 + $0x10] sm:$0xff]
      %v1261 = vld [vmem:[%s1 + $0x18] sm:$0xff]
      %v1262 = vld [vmem:[%s1 + $0x20] sm:$0xff]
      %v1263 = vld [vmem:[%s1 + $0x28] sm:$0xff]
      %v1264 = vld [vmem:[%s1 + $0x30] sm:$0xff]
      %v1265 = vld [vmem:[%s1 + $0x38] sm:$0xff]
      %v1266 = vld [vmem:[%s1 + $0x40] sm:$0xff]
      %v1267 = vld [vmem:[%s1 + $0x48] sm:$0xff]
      %v1268 = vld [vmem:[%s1 + $0x50] sm:$0xff]
      %v1269 = vld [vmem:[%s1 + $0x58] sm:$0xff]
      %v1270 = vld [vmem:[%s1 + $0x60] sm:$0xff]
      %v1271 = vld [vmem:[%s1 + $0x68] sm:$0xff]
      %v1272 = vld [vmem:[%s1 + $0x70] sm:$0xff]
      %v1273 = vld [vmem:[%s1 + $0x78] sm:$0xff]
      %1274 = vxpose.xlu0.b32.start [1/16] %v693, 128
      %1275 = vxpose.xlu0.b32.cont [2/16] %v695, 128
      %1276 = vxpose.xlu0.b32.cont [3/16] %v697, 128
      %1277 = vxpose.xlu0.b32.cont [4/16] %v699, 128
      %1278 = vxpose.xlu0.b32.cont [5/16] %v701, 128
      %1279 = vxpose.xlu0.b32.cont [6/16] %v703, 128
      %1280 = vxpose.xlu0.b32.cont [7/16] %v705, 128
      %1281 = vxpose.xlu0.b32.cont [8/16] %v707, 128
      %1282 = vxpose.xlu0.b32.cont [9/16] %v1242, 128
      %1283 = vxpose.xlu0.b32.cont [10/16] %v1244, 128
      %1284 = vxpose.xlu0.b32.cont [11/16] %v1246, 128
      %1285 = vxpose.xlu0.b32.cont [12/16] %v1248, 128
      %1286 = vxpose.xlu0.b32.cont [13/16] %v1250, 128
      %1287 = vxpose.xlu0.b32.cont [14/16] %v1252, 128
      %1288 = vxpose.xlu0.b32.cont [15/16] %v1254, 128
      %1289 = vxpose.xlu0.b32.end [16/16] %v1256, 128
      %v1290 = vpop.trf.xlu0
      %v1291 = vpop.trf.xlu0
      %v1292 = vpop.trf.xlu0
      %v1293 = vpop.trf.xlu0
      %v1294 = vpop.trf.xlu0
      %v1295 = vpop.trf.xlu0
      %v1296 = vpop.trf.xlu0
      %v1297 = vpop.trf.xlu0
      %v1298 = vpop.trf.xlu0
      %v1299 = vpop.trf.xlu0
      %v1300 = vpop.trf.xlu0
      %v1301 = vpop.trf.xlu0
      %v1302 = vpop.trf.xlu0
      %v1303 = vpop.trf.xlu0
      %v1304 = vpop.trf.xlu0
      %v1305 = vpop.trf.xlu0
      %1306 = vxpose.xlu0.b32.start [1/16] %v694, 128
      %1307 = vxpose.xlu0.b32.cont [2/16] %v696, 128
      %1308 = vxpose.xlu0.b32.cont [3/16] %v698, 128
      %1309 = vxpose.xlu0.b32.cont [4/16] %v700, 128
      %1310 = vxpose.xlu0.b32.cont [5/16] %v702, 128
      %1311 = vxpose.xlu0.b32.cont [6/16] %v704, 128
      %1312 = vxpose.xlu0.b32.cont [7/16] %v706, 128
      %1313 = vxpose.xlu0.b32.cont [8/16] %v708, 128
      %1314 = vxpose.xlu0.b32.cont [9/16] %v1243, 128
      %1315 = vxpose.xlu0.b32.cont [10/16] %v1245, 128
      %1316 = vxpose.xlu0.b32.cont [11/16] %v1247, 128
      %1317 = vxpose.xlu0.b32.cont [12/16] %v1249, 128
      %1318 = vxpose.xlu0.b32.cont [13/16] %v1251, 128
      %1319 = vxpose.xlu0.b32.cont [14/16] %v1253, 128
      %1320 = vxpose.xlu0.b32.cont [15/16] %v1255, 128
      %1321 = vxpose.xlu0.b32.end [16/16] %v1257, 128
      %v1322 = vpop.trf.xlu0
      %v1323 = vpop.trf.xlu0
      %v1324 = vpop.trf.xlu0
      %v1325 = vpop.trf.xlu0
      %v1326 = vpop.trf.xlu0
      %v1327 = vpop.trf.xlu0
      %v1328 = vpop.trf.xlu0
      %v1329 = vpop.trf.xlu0
      %v1330 = vpop.trf.xlu0
      %v1331 = vpop.trf.xlu0
      %v1332 = vpop.trf.xlu0
      %v1333 = vpop.trf.xlu0
      %v1334 = vpop.trf.xlu0
      %v1335 = vpop.trf.xlu0
      %v1336 = vpop.trf.xlu0
      %v1337 = vpop.trf.xlu0
      %1338 = vmatpush.msra.mxu0 %v1273
      %1339 = vmatpush.msra.mxu0 %v1272
      %1340 = vmatpush.msra.mxu0 %v1271
      %1341 = vmatpush.msra.mxu0 %v1270
      %1342 = vmatpush.msra.mxu0 %v1269
      %1343 = vmatpush.msra.mxu0 %v1268
      %1344 = vmatpush.msra.mxu0 %v1267
      %1345 = vmatpush.msra.mxu0 %v1266
      %1346 = vmatpush.msra.mxu0 %v1265
      %1347 = vmatpush.msra.mxu0 %v1264
      %1348 = vmatpush.msra.mxu0 %v1263
      %1349 = vmatpush.msra.mxu0 %v1262
      %1350 = vmatpush.msra.mxu0 %v1261
      %1351 = vmatpush.msra.mxu0 %v1260
      %1352 = vmatpush.msra.mxu0 %v1259
      %1353 = vmatpush.msra.mxu0 %v1258
      %1354 = vmatmul.f32.gmra.mxu0 %v1290
      %v1355 = vpop.f32.mrf.mxu0
      %v1356 = vadd.f32 0.0, %v1355
      %1357 = vmatmul.f32.gmra.mxu0 %v1291
      %v1358 = vpop.f32.mrf.mxu0
      %v1359 = vadd.f32 0.0, %v1358
      %1360 = vmatmul.f32.gmra.mxu0 %v1292
      %v1361 = vpop.f32.mrf.mxu0
      %v1362 = vadd.f32 0.0, %v1361
      %1363 = vmatmul.f32.gmra.mxu0 %v1293
      %v1364 = vpop.f32.mrf.mxu0
      %v1365 = vadd.f32 0.0, %v1364
      %1366 = vmatmul.f32.gmra.mxu0 %v1294
      %v1367 = vpop.f32.mrf.mxu0
      %v1368 = vadd.f32 0.0, %v1367
      %1369 = vmatmul.f32.gmra.mxu0 %v1295
      %v1370 = vpop.f32.mrf.mxu0
      %v1371 = vadd.f32 0.0, %v1370
      %1372 = vmatmul.f32.gmra.mxu0 %v1296
      %v1373 = vpop.f32.mrf.mxu0
      %v1374 = vadd.f32 0.0, %v1373
      %1375 = vmatmul.f32.gmra.mxu0 %v1297
      %v1376 = vpop.f32.mrf.mxu0
      %v1377 = vadd.f32 0.0, %v1376
      %1378 = vmatmul.f32.gmra.mxu0 %v1298
      %v1379 = vpop.f32.mrf.mxu0
      %v1380 = vadd.f32 0.0, %v1379
      %1381 = vmatmul.f32.gmra.mxu0 %v1299
      %v1382 = vpop.f32.mrf.mxu0
      %v1383 = vadd.f32 0.0, %v1382
      %1384 = vmatmul.f32.gmra.mxu0 %v1300
      %v1385 = vpop.f32.mrf.mxu0
      %v1386 = vadd.f32 0.0, %v1385
      %1387 = vmatmul.f32.gmra.mxu0 %v1301
      %v1388 = vpop.f32.mrf.mxu0
      %v1389 = vadd.f32 0.0, %v1388
      %1390 = vmatmul.f32.gmra.mxu0 %v1302
      %v1391 = vpop.f32.mrf.mxu0
      %v1392 = vadd.f32 0.0, %v1391
      %1393 = vmatmul.f32.gmra.mxu0 %v1303
      %v1394 = vpop.f32.mrf.mxu0
      %v1395 = vadd.f32 0.0, %v1394
      %1396 = vmatmul.f32.gmra.mxu0 %v1304
      %v1397 = vpop.f32.mrf.mxu0
      %v1398 = vadd.f32 0.0, %v1397
      %1399 = vmatmul.f32.gmra.mxu0 %v1305
      %v1400 = vpop.f32.mrf.mxu0
      %v1401 = vadd.f32 0.0, %v1400
      %1402 = vmatmul.f32.gmra.mxu0 %v1322
      %v1403 = vpop.f32.mrf.mxu0
      %v1404 = vadd.f32 0.0, %v1403
      %1405 = vmatmul.f32.gmra.mxu0 %v1323
      %v1406 = vpop.f32.mrf.mxu0
      %v1407 = vadd.f32 0.0, %v1406
      %1408 = vmatmul.f32.gmra.mxu0 %v1324
      %v1409 = vpop.f32.mrf.mxu0
      %v1410 = vadd.f32 0.0, %v1409
      %1411 = vmatmul.f32.gmra.mxu0 %v1325
      %v1412 = vpop.f32.mrf.mxu0
      %v1413 = vadd.f32 0.0, %v1412
      %1414 = vmatmul.f32.gmra.mxu0 %v1326
      %v1415 = vpop.f32.mrf.mxu0
      %v1416 = vadd.f32 0.0, %v1415
      %1417 = vmatmul.f32.gmra.mxu0 %v1327
      %v1418 = vpop.f32.mrf.mxu0
      %v1419 = vadd.f32 0.0, %v1418
      %1420 = vmatmul.f32.gmra.mxu0 %v1328
      %v1421 = vpop.f32.mrf.mxu0
      %v1422 = vadd.f32 0.0, %v1421
      %1423 = vmatmul.f32.gmra.mxu0 %v1329
      %v1424 = vpop.f32.mrf.mxu0
      %v1425 = vadd.f32 0.0, %v1424
      %1426 = vmatmul.f32.gmra.mxu0 %v1330
      %v1427 = vpop.f32.mrf.mxu0
      %v1428 = vadd.f32 0.0, %v1427
      %1429 = vmatmul.f32.gmra.mxu0 %v1331
      %v1430 = vpop.f32.mrf.mxu0
      %v1431 = vadd.f32 0.0, %v1430
      %1432 = vmatmul.f32.gmra.mxu0 %v1332
      %v1433 = vpop.f32.mrf.mxu0
      %v1434 = vadd.f32 0.0, %v1433
      %1435 = vmatmul.f32.gmra.mxu0 %v1333
      %v1436 = vpop.f32.mrf.mxu0
      %v1437 = vadd.f32 0.0, %v1436
      %1438 = vmatmul.f32.gmra.mxu0 %v1334
      %v1439 = vpop.f32.mrf.mxu0
      %v1440 = vadd.f32 0.0, %v1439
      %1441 = vmatmul.f32.gmra.mxu0 %v1335
      %v1442 = vpop.f32.mrf.mxu0
      %v1443 = vadd.f32 0.0, %v1442
      %1444 = vmatmul.f32.gmra.mxu0 %v1336
      %v1445 = vpop.f32.mrf.mxu0
      %v1446 = vadd.f32 0.0, %v1445
      %1447 = vmatmul.f32.gmra.mxu0 %v1337
      %v1448 = vpop.f32.mrf.mxu0
      %v1449 = vadd.f32 0.0, %v1448
      %1450 = vdwg.mxu0
      %vm1451 = vcmask 523264
      %1452 = vst.msk [vmem:[%s145] sm:$0xff] %vm1451, %v1356
      %1453 = vst.msk [vmem:[%s145 + $0x8] sm:$0xff] %vm1451, %v1359
      %1454 = vst.msk [vmem:[%s145 + $0x10] sm:$0xff] %vm1451, %v1362
      %1455 = vst.msk [vmem:[%s145 + $0x18] sm:$0xff] %vm1451, %v1365
      %1456 = vst.msk [vmem:[%s145 + $0x20] sm:$0xff] %vm1451, %v1368
      %1457 = vst.msk [vmem:[%s145 + $0x28] sm:$0xff] %vm1451, %v1371
      %1458 = vst.msk [vmem:[%s145 + $0x30] sm:$0xff] %vm1451, %v1374
      %1459 = vst.msk [vmem:[%s145 + $0x38] sm:$0xff] %vm1451, %v1377
      %1460 = vst.msk [vmem:[%s145 + $0x40] sm:$0xff] %vm1451, %v1380
      %1461 = vst.msk [vmem:[%s145 + $0x48] sm:$0xff] %vm1451, %v1383
      %1462 = vst.msk [vmem:[%s145 + $0x50] sm:$0xff] %vm1451, %v1386
      %1463 = vst.msk [vmem:[%s145 + $0x58] sm:$0xff] %vm1451, %v1389
      %1464 = vst.msk [vmem:[%s145 + $0x60] sm:$0xff] %vm1451, %v1392
      %1465 = vst.msk [vmem:[%s145 + $0x68] sm:$0xff] %vm1451, %v1395
      %1466 = vst.msk [vmem:[%s145 + $0x70] sm:$0xff] %vm1451, %v1398
      %1467 = vst.msk [vmem:[%s145 + $0x78] sm:$0xff] %vm1451, %v1401
      %1468 = vst.msk [vmem:[%s145 + $0x80] sm:$0xff] %vm1451, %v1404
      %1469 = vst.msk [vmem:[%s145 + $0x88] sm:$0xff] %vm1451, %v1407
      %1470 = vst.msk [vmem:[%s145 + $0x90] sm:$0xff] %vm1451, %v1410
      %1471 = vst.msk [vmem:[%s145 + $0x98] sm:$0xff] %vm1451, %v1413
      %1472 = vst.msk [vmem:[%s145 + $0xa0] sm:$0xff] %vm1451, %v1416
      %1473 = vst.msk [vmem:[%s145 + $0xa8] sm:$0xff] %vm1451, %v1419
      %1474 = vst.msk [vmem:[%s145 + $0xb0] sm:$0xff] %vm1451, %v1422
      %1475 = vst.msk [vmem:[%s145 + $0xb8] sm:$0xff] %vm1451, %v1425
      %1476 = vst.msk [vmem:[%s145 + $0xc0] sm:$0xff] %vm1451, %v1428
      %1477 = vst.msk [vmem:[%s145 + $0xc8] sm:$0xff] %vm1451, %v1431
      %1478 = vst.msk [vmem:[%s145 + $0xd0] sm:$0xff] %vm1451, %v1434
      %1479 = vst.msk [vmem:[%s145 + $0xd8] sm:$0xff] %vm1451, %v1437
      %1480 = vst.msk [vmem:[%s145 + $0xe0] sm:$0xff] %vm1451, %v1440
      %1481 = vst.msk [vmem:[%s145 + $0xe8] sm:$0xff] %vm1451, %v1443
      %1482 = vst.msk [vmem:[%s145 + $0xf0] sm:$0xff] %vm1451, %v1446
      %1483 = vst.msk [vmem:[%s145 + $0xf8] sm:$0xff] %vm1451, %v1449
      %s1484 = smul.u32 32, %s13
      %p1485 = scmp.lt.s32.totalorder %s1484, 63
      %s1486 = scalar_select %p1485, %s1484, 63
      %s1487 = smul.addr %s1486, 8
      %s1488 = scalar_lea.vmem %s2, %s1487
      // Predicated region
      $region29: #{tpu_custom_call.1} parent=27 // pred_check
        %p1489 = pneg %p78
      $region30: #{tpu_custom_call.1} parent=27 // pred_check_branch
        %1491 = sbr.rel (%p1489) target = $region32
      $region31: #{tpu_custom_call.1} parent=27 // pred_region
        %s1492 = smul.u32 32, %s13
      $region32: #{tpu_custom_call.1} parent=27 // pred_fallthru
        _
    $region28: #{tpu_custom_call.1} parent=5 // pred_fallthru
      _
    %p1493 = scmp.le.s32.totalorder 2, %s8
    // Predicated region
    $region33: #{tpu_custom_call.1} parent=5 // pred_check
      %p1494 = pneg %p1493
    $region34: #{tpu_custom_call.1} parent=5 // pred_check_branch
      %1496 = sbr.rel (%p1494) target = $region36
    $region35: #{tpu_custom_call.1} parent=5 // pred_region
      %s1497 = ssub.s32 %s8, 2
      // Predicated region
      $region37: #{tpu_custom_call.1} parent=35 // pred_check
        %p1498 = pneg %p84
      $region38: #{tpu_custom_call.1} parent=35 // pred_check_branch
        %1500 = sbr.rel (%p1498) target = $region40
      $region39: #{tpu_custom_call.1} parent=35 // pred_region
        %s1501 = smul.u32 32, %s14
        %p1502 = scmp.lt.s32.totalorder %s1501, 63
        %s1503 = scalar_select %p1502, %s1501, 63
        %s1504 = smul.addr %s1503, 8
        %s1505 = scalar_lea.vmem %s2, %s1504
      $region40: #{tpu_custom_call.1} parent=35 // pred_fallthru
        _
    $region36: #{tpu_custom_call.1} parent=5 // pred_fallthru
      _
  $region6: #{tpu_custom_call.1} parent=0 // loop_footer
    %s12 = sadd.s32 1, %s8
  $region7: #{tpu_custom_call.1} parent=0 // loop_footer_branch
    %7 = sbr.rel target = $region3
  $region8: #{tpu_custom_call.1} parent=0 // loop_exit
    _

</llo_original>
